<compile_context>
chip_gen: v7x
topology: tpu7x:2x2x1
jax: 0.10.0
libtpu: 0.0.40
codegen_flags: <defaults>
</compile_context>

<pallas_src>
import functools

import jax
import jax.numpy as jnp
from jax.experimental import pallas as pl
from jax.experimental.pallas import tpu as pltpu


# ---------------------------------------------------------------------------
# Single fused kernel: GRU recurrence (statically unrolled over T) + batched head.
# ---------------------------------------------------------------------------
def decoder_kernel(gx_ref, wall_ref, misc_ref, out_ref, obuf_ref):
    T, B, G = gx_ref.shape            # gx: (T, B, 3H) = x@W_ih + b_ih + b_hh[r,z]
    H = G // 3
    Vp = out_ref.shape[1]

    # --- one-time unpack of the packed operands (all tiny, outside the loop) ---
    wall = wall_ref[...]                               # (H, 3H + H + Vp)
    whh = wall[:, 0:3 * H]                             # (H, 3H) fused recurrent weights (r|z|n)
    w1 = wall[:, 3 * H:4 * H]                          # (H, H)  output Linear 1
    w2 = wall[:, 4 * H:4 * H + Vp]                     # (H, Vp) output Linear 2 (vocab padded)

    misc = misc_ref[...]                               # (3 + B, Vp)
    bhn_b = jnp.broadcast_to(misc[0:1, 0:H], (B, H))   # hoisted (1,H)->(B,H) broadcast
    b1 = misc[1:2, 0:H]                                # (1, H)
    b2 = misc[2:3, :]                                  # (1, Vp)  padded lanes = -1e30
    h = misc[3:3 + B, 0:H]                             # (B, H)   initial hidden state
    lens = misc[3:3 + B, H:H + 1]                      # (B, 1)   lengths (exact small ints in f32)

    # --- recurrence: only h @ W_hh + gate math on the serial chain ---
    for t in range(T):                                 # T static -> full unroll
        gx = gx_ref[t]                                              # (B, 3H)
        gh = jnp.dot(h, whh, preferred_element_type=jnp.float32)    # (B, 3H), one MXU push

        # PyTorch nn.GRU gate order: r, z, n (lane slices of the fused result).
        r = jax.nn.sigmoid(gx[:, 0:H] + gh[:, 0:H])
        z = jax.nn.sigmoid(gx[:, H:2 * H] + gh[:, H:2 * H])
        n = jnp.tanh(gx[:, 2 * H:3 * H] + r * (gh[:, 2 * H:3 * H] + bhn_b))
        h_new = (1.0 - z) * n + z * h

        valid = lens > float(t)                                     # (B, 1)
        obuf_ref[t * B:(t + 1) * B, :] = jnp.where(valid, h_new, 0.0)  # zero-fill finished rows
        h = jnp.where(valid, h_new, h)                              # freeze finished state

    # --- batched output head (once, off the recurrent chain) ---
    o_all = obuf_ref[...]                                                   # (T*B, H)
    h1 = jnp.dot(o_all, w1, preferred_element_type=jnp.float32) + b1        # (T*B, H)
    logits = jnp.dot(h1, w2, preferred_element_type=jnp.float32) + b2       # (T*B, Vp)
    m = jnp.max(logits, axis=-1, keepdims=True)
    s = logits - m
    lse = jnp.log(jnp.sum(jnp.exp(s), axis=-1, keepdims=True))
    out_ref[...] = s - lse                                                  # dense (8,128) tiles


# ---------------------------------------------------------------------------
# One-time parameter fusion / padding / packing (keep OUT of the per-call path).
# ---------------------------------------------------------------------------
def prepare_params(params):
    f32 = jnp.float32
    H = params["w_hh"].shape[-1]
    V = params["w_out2"].shape[-1]
    Vp = ((V + 127) // 128) * 128
    assert Vp >= H + 1, "packing of h0/lengths into the misc slab needs Vp >= H+1"

    # Fuse gate weights along the output dim (gate order r|z|n).
    w_ih_f = jnp.concatenate([params["w_ih"][g] for g in range(3)], axis=1).astype(f32)  # (E, 3H)
    w_hh_f = jnp.concatenate([params["w_hh"][g] for g in range(3)], axis=1).astype(f32)  # (H, 3H)
    b_ih_f = params["b_ih"].astype(f32).reshape(1, 3 * H)                                # (1, 3H)
    b_hh = params["b_hh"].astype(f32)                                                    # (3, 1, H)
    # Fold r/z recurrent biases into the non-recurrent projection; only the n-gate
    # recurrent bias stays in the loop (needed for r * (W_hn h + b_hn)).
    b_rz_fold = jnp.concatenate([b_hh[0], b_hh[1], jnp.zeros((1, H), f32)], axis=1)      # (1, 3H)
    gx_bias = b_ih_f + b_rz_fold                                                         # (1, 3H)
    b_hh_n = b_hh[2]                                                                     # (1, H)

    # Output head; pad vocab dim to a 128-lane multiple (padded logit lanes get -1e30
    # bias -> exp(...) == 0 in the log-softmax denominator).
    w1 = params["w_out1"].astype(f32)                                                    # (H, H)
    b1 = params["b_out1"].astype(f32)                                                    # (1, H)
    w2p = jnp.pad(params["w_out2"].astype(f32), ((0, 0), (0, Vp - V)))                   # (H, Vp)
    b2p = jnp.pad(params["b_out2"].astype(f32), ((0, 0), (0, Vp - V)),
                  constant_values=-1e30)                                                 # (1, Vp)

    # Packed operands: one weight slab + the constant bias rows of the misc slab.
    wall = jnp.concatenate([w_hh_f, w1, w2p], axis=1)                                    # (H, 4H+Vp)
    pad_vp = lambda a: jnp.pad(a, ((0, 0), (0, Vp - a.shape[1])))
    bias_rows = jnp.concatenate([pad_vp(b_hh_n), pad_vp(b1), b2p], axis=0)               # (3, Vp)

    return {"w_ih_f": w_ih_f, "gx_bias": gx_bias, "wall": wall, "bias_rows": bias_rows,
            "H": H, "V": V, "Vp": Vp}


# ---------------------------------------------------------------------------
# Wrapper: hoisted input projection + one pallas_call.
# ---------------------------------------------------------------------------
def rnn_decoder_forward(inputs, lengths, memory, state, packed):
    """inputs: (B, T, E) f32, lengths: (B,) i32, memory: (B, S, H) (unused,
    attention_mode=None), state: (1, B, H) f32.  Returns (B, T, V) log-probs."""
    del memory  # attention_mode is None -> memory is never read in forward
    B, T, E = inputs.shape
    H, V, Vp = packed["H"], packed["V"], packed["Vp"]
    f32 = jnp.float32

    # Hoisted input projection for all timesteps at once, emitted time-major so the
    # kernel indexes it with a cheap leading-dim index (no in-kernel transposes).
    gx_tm = jnp.einsum("bte,eg->tbg", inputs.astype(f32), packed["w_ih_f"]) \
        + packed["gx_bias"]                                                  # (T, B, 3H)

    # misc slab rows 3..3+B-1: [ h0[b] (H lanes) | length[b] at lane H | zeros ]
    h0 = state[0].astype(f32)                                                # (B, H)
    lens_f = lengths.astype(f32).reshape(B, 1)
    h0_rows = jnp.pad(jnp.concatenate([h0, lens_f], axis=1),
                      ((0, 0), (0, Vp - (H + 1))))                           # (B, Vp)
    misc = jnp.concatenate([packed["bias_rows"], h0_rows], axis=0)           # (3+B, Vp)

    out_flat = pl.pallas_call(
        decoder_kernel,
        out_shape=jax.ShapeDtypeStruct((T * B, Vp), f32),
        grid=(1,),
        in_specs=[
            pl.BlockSpec((T, B, 3 * H), lambda i: (0, 0, 0)),     # gx (time-major)
            pl.BlockSpec((H, 4 * H + Vp), lambda i: (0, 0)),      # packed weights
            pl.BlockSpec((3 + B, Vp), lambda i: (0, 0)),          # packed biases/h0/lengths
        ],
        out_specs=pl.BlockSpec((T * B, Vp), lambda i: (0, 0)),
        scratch_shapes=[pltpu.VMEM((T * B, H), f32)],             # GRU outputs slab
        compiler_params=pltpu.CompilerParams(dimension_semantics=("arbitrary",)),
    )(gx_tm, packed["wall"], misc)

    # time-major (T*B, Vp) -> (B, T, V); drop padded vocab lanes.
    return out_flat.reshape(T, B, Vp).transpose(1, 0, 2)[:, :, :V]


# ---------------------------------------------------------------------------
# Pure-JAX reference (mirrors the PyTorch forward exactly).
# ---------------------------------------------------------------------------
def ref_forward(inputs, lengths, state, params):
    B, T, E = inputs.shape
    h = state[0]
    outs = []
    for t in range(T):
        x_t = inputs[:, t, :]
        gx_r = x_t @ params["w_ih"][0] + params["b_ih"][0]
        gx_z = x_t @ params["w_ih"][1] + params["b_ih"][1]
        gx_n = x_t @ params["w_ih"][2] + params["b_ih"][2]
        gh_r = h @ params["w_hh"][0] + params["b_hh"][0]
        gh_z = h @ params["w_hh"][1] + params["b_hh"][1]
        gh_n = h @ params["w_hh"][2] + params["b_hh"][2]
        r = jax.nn.sigmoid(gx_r + gh_r)
        z = jax.nn.sigmoid(gx_z + gh_z)
        n = jnp.tanh(gx_n + r * gh_n)
        h_new = (1.0 - z) * n + z * h
        valid = (lengths > t)[:, None]
        outs.append(jnp.where(valid, h_new, 0.0))
        h = jnp.where(valid, h_new, h)
    rnn_out = jnp.stack(outs, axis=1)                              # (B, T, H)
    h1 = rnn_out @ params["w_out1"] + params["b_out1"][0]
    logits = h1 @ params["w_out2"] + params["b_out2"][0]
    return jax.nn.log_softmax(logits, axis=-1)


# ---------------------------------------------------------------------------
# Deterministic parameter construction (shapes from the module __init__).
# ---------------------------------------------------------------------------
def make_params(key, input_size, hidden_units, output_size):
    ks = jax.random.split(key, 8)
    sc = 1.0 / jnp.sqrt(hidden_units)
    u = lambda k, shape: jax.random.uniform(k, shape, jnp.float32, -sc, sc)
    return {
        # nn.GRU weights, split per gate (r, z, n), stored (in, out).
        "w_ih": u(ks[0], (3, input_size, hidden_units)),
        "w_hh": u(ks[1], (3, hidden_units, hidden_units)),
        "b_ih": u(ks[2], (3, 1, hidden_units)),
        "b_hh": u(ks[3], (3, 1, hidden_units)),
        # output head: Linear(H, H), Linear(H, V)
        "w_out1": u(ks[4], (hidden_units, hidden_units)),
        "b_out1": u(ks[5], (1, hidden_units)),
        "w_out2": u(ks[6], (hidden_units, output_size)),
        "b_out2": u(ks[7], (1, output_size)),
    }


if __name__ == "__main__":
    # config: input_size=16, hidden_units=32, cn_vocab_size=60 -> output_size=64,
    #         num_layers=1, dropout=0.0, embedder=None, attention_mode=None.
    B, T, E, H = 4, 8, 16, 32
    V = 60 + 4
    S_ENC = 6

    key = jax.random.PRNGKey(0)
    k_par, k_x, k_mem, k_st = jax.random.split(key, 4)

    params = make_params(k_par, E, H, V)
    inputs = jax.random.normal(k_x, (B, T, E), jnp.float32)
    lengths = jnp.array([8, 5, 3, 6], dtype=jnp.int32)
    memory = jax.random.normal(k_mem, (B, S_ENC, H), jnp.float32)  # unused (no attention)
    state = jax.random.normal(k_st, (1, B, H), jnp.float32)        # (num_layers, B, H)

    packed = prepare_params(params)   # one-time weight fusion/padding/packing
    fwd = jax.jit(functools.partial(rnn_decoder_forward, packed=packed))

    probs = fwd(inputs, lengths, memory, state)
    probs = jax.block_until_ready(probs)

    ref = ref_forward(inputs, lengths, state, params)
    assert probs.shape == (B, T, V), probs.shape
    assert jnp.allclose(probs, ref, atol=1e-4, rtol=1e-4), (
        float(jnp.max(jnp.abs(probs - ref))))

    print("KERNEL_OK")
</pallas_src>

<mosaic_0001>
module attributes {stable_mosaic.version = 11 : i64} {
  func.func @decoder_kernel(%arg0: i32, %arg1: memref<8x4x96xf32, #tpu.memory_space<vmem>>, %arg2: memref<32x256xf32, #tpu.memory_space<vmem>>, %arg3: memref<7x128xf32, #tpu.memory_space<vmem>>, %arg4: memref<32x128xf32, #tpu.memory_space<vmem>>, %arg5: memref<32x32xf32, #tpu.memory_space<vmem>>) attributes {dimension_semantics = [#tpu.dimension_semantics<arbitrary>], iteration_bounds = array<i64: 1>, scalar_prefetch = 0 : i64, scratch_operands = 1 : i64, tpu.core_type = #tpu.core_type<tc>, window_params = [{pipeline_mode = #tpu.pipeline_mode<synchronous>, transform_indices = @transform_0, window_bounds = array<i64: 8, 4, 96>}, {pipeline_mode = #tpu.pipeline_mode<synchronous>, transform_indices = @transform_1, window_bounds = array<i64: 32, 256>}, {pipeline_mode = #tpu.pipeline_mode<synchronous>, transform_indices = @transform_2, window_bounds = array<i64: 7, 128>}, {pipeline_mode = #tpu.pipeline_mode<synchronous>, transform_indices = @transform_3, window_bounds = array<i64: 32, 128>}]} {
    %c0 = arith.constant 0 : index
    %c0_0 = arith.constant 0 : index
    %0 = vector.load %arg2[%c0, %c0_0] : memref<32x256xf32, #tpu.memory_space<vmem>>, vector<32x256xf32>
    %1 = vector.extract_strided_slice %0 {offsets = [0, 0], sizes = [32, 96], strides = [1, 1]} : vector<32x256xf32> to vector<32x96xf32>
    %2 = vector.extract_strided_slice %0 {offsets = [0, 96], sizes = [32, 32], strides = [1, 1]} : vector<32x256xf32> to vector<32x32xf32>
    %3 = vector.extract_strided_slice %0 {offsets = [0, 128], sizes = [32, 128], strides = [1, 1]} : vector<32x256xf32> to vector<32x128xf32>
    %c0_1 = arith.constant 0 : index
    %c0_2 = arith.constant 0 : index
    %4 = vector.load %arg3[%c0_1, %c0_2] : memref<7x128xf32, #tpu.memory_space<vmem>>, vector<7x128xf32>
    %5 = vector.extract_strided_slice %4 {offsets = [0, 0], sizes = [1, 32], strides = [1, 1]} : vector<7x128xf32> to vector<1x32xf32>
    %6 = vector.shape_cast %5 : vector<1x32xf32> to vector<1x32xf32>
    %7 = vector.broadcast %6 : vector<1x32xf32> to vector<4x32xf32>
    %8 = vector.extract_strided_slice %4 {offsets = [1, 0], sizes = [1, 32], strides = [1, 1]} : vector<7x128xf32> to vector<1x32xf32>
    %9 = vector.extract_strided_slice %4 {offsets = [2, 0], sizes = [1, 128], strides = [1, 1]} : vector<7x128xf32> to vector<1x128xf32>
    %10 = vector.extract_strided_slice %4 {offsets = [3, 0], sizes = [4, 32], strides = [1, 1]} : vector<7x128xf32> to vector<4x32xf32>
    %11 = vector.extract_strided_slice %4 {offsets = [3, 32], sizes = [4, 1], strides = [1, 1]} : vector<7x128xf32> to vector<4x1xf32>
    %c0_3 = arith.constant 0 : index
    %c0_4 = arith.constant 0 : index
    %c0_5 = arith.constant 0 : index
    %12 = vector.load %arg1[%c0_3, %c0_4, %c0_5] : memref<8x4x96xf32, #tpu.memory_space<vmem>>, vector<1x4x96xf32>
    %13 = vector.shape_cast %12 : vector<1x4x96xf32> to vector<4x96xf32>
    %cst = arith.constant dense<0.000000e+00> : vector<4x96xf32>
    %14 = tpu.matmul %10, %1, %cst {dimension_numbers = #tpu.dot_dimension_numbers<[1], [0], [0], [1], [0, 0, 1, 1], [], []>} : vector<4x32xf32>, vector<32x96xf32>, vector<4x96xf32> -> vector<4x96xf32>
    %15 = vector.extract_strided_slice %13 {offsets = [0, 0], sizes = [4, 32], strides = [1, 1]} : vector<4x96xf32> to vector<4x32xf32>
    %16 = vector.extract_strided_slice %14 {offsets = [0, 0], sizes = [4, 32], strides = [1, 1]} : vector<4x96xf32> to vector<4x32xf32>
    %17 = arith.addf %15, %16 : vector<4x32xf32>
    %18 = arith.negf %17 : vector<4x32xf32>
    %19 = math.exp %18 : vector<4x32xf32>
    %cst_6 = arith.constant 1.000000e+00 : f32
    %20 = vector.broadcast %cst_6 : f32 to vector<4x32xf32>
    %21 = arith.addf %20, %19 : vector<4x32xf32>
    %22 = arith.divf %20, %21 : vector<4x32xf32>
    %23 = vector.extract_strided_slice %13 {offsets = [0, 32], sizes = [4, 32], strides = [1, 1]} : vector<4x96xf32> to vector<4x32xf32>
    %24 = vector.extract_strided_slice %14 {offsets = [0, 32], sizes = [4, 32], strides = [1, 1]} : vector<4x96xf32> to vector<4x32xf32>
    %25 = arith.addf %23, %24 : vector<4x32xf32>
    %26 = arith.negf %25 : vector<4x32xf32>
    %27 = math.exp %26 : vector<4x32xf32>
    %cst_7 = arith.constant 1.000000e+00 : f32
    %28 = vector.broadcast %cst_7 : f32 to vector<4x32xf32>
    %29 = arith.addf %28, %27 : vector<4x32xf32>
    %30 = arith.divf %28, %29 : vector<4x32xf32>
    %31 = vector.extract_strided_slice %13 {offsets = [0, 64], sizes = [4, 32], strides = [1, 1]} : vector<4x96xf32> to vector<4x32xf32>
    %32 = vector.extract_strided_slice %14 {offsets = [0, 64], sizes = [4, 32], strides = [1, 1]} : vector<4x96xf32> to vector<4x32xf32>
    %33 = arith.addf %32, %7 : vector<4x32xf32>
    %34 = arith.mulf %22, %33 : vector<4x32xf32>
    %35 = arith.addf %31, %34 : vector<4x32xf32>
    %36 = math.tanh %35 : vector<4x32xf32>
    %cst_8 = arith.constant 1.000000e+00 : f32
    %37 = vector.broadcast %cst_8 : f32 to vector<4x32xf32>
    %38 = arith.subf %37, %30 : vector<4x32xf32>
    %39 = arith.mulf %38, %36 : vector<4x32xf32>
    %40 = arith.mulf %30, %10 : vector<4x32xf32>
    %41 = arith.addf %39, %40 : vector<4x32xf32>
    %cst_9 = arith.constant 0.000000e+00 : f32
    %42 = vector.broadcast %cst_9 : f32 to vector<4x1xf32>
    %43 = arith.cmpf ogt, %11, %42 : vector<4x1xf32>
    %cst_10 = arith.constant 0.000000e+00 : f32
    %44 = vector.shape_cast %43 : vector<4x1xi1> to vector<4x1xi1>
    %45 = vector.broadcast %44 : vector<4x1xi1> to vector<4x32xi1>
    %46 = vector.broadcast %cst_10 : f32 to vector<4x32xf32>
    %47 = arith.select %45, %41, %46 : vector<4x32xi1>, vector<4x32xf32>
    %c0_11 = arith.constant 0 : index
    %c0_12 = arith.constant 0 : index
    %48 = vector.load %arg5[%c0_11, %c0_12] : memref<32x32xf32, #tpu.memory_space<vmem>>, vector<4x32xf32>
    tpu.vector_store %arg5[%c0_11, %c0_12], %47 {strides = array<i32>} : memref<32x32xf32, #tpu.memory_space<vmem>>, vector<4x32xf32>,
    %49 = vector.shape_cast %43 : vector<4x1xi1> to vector<4x1xi1>
    %50 = vector.broadcast %49 : vector<4x1xi1> to vector<4x32xi1>
    %51 = arith.select %50, %41, %10 : vector<4x32xi1>, vector<4x32xf32>
    %c1 = arith.constant 1 : index
    %c0_13 = arith.constant 0 : index
    %c0_14 = arith.constant 0 : index
    %52 = vector.load %arg1[%c1, %c0_13, %c0_14] : memref<8x4x96xf32, #tpu.memory_space<vmem>>, vector<1x4x96xf32>
    %53 = vector.shape_cast %52 : vector<1x4x96xf32> to vector<4x96xf32>
    %cst_15 = arith.constant dense<0.000000e+00> : vector<4x96xf32>
    %54 = tpu.matmul %51, %1, %cst_15 {dimension_numbers = #tpu.dot_dimension_numbers<[1], [0], [0], [1], [0, 0, 1, 1], [], []>} : vector<4x32xf32>, vector<32x96xf32>, vector<4x96xf32> -> vector<4x96xf32>
    %55 = vector.extract_strided_slice %53 {offsets = [0, 0], sizes = [4, 32], strides = [1, 1]} : vector<4x96xf32> to vector<4x32xf32>
    %56 = vector.extract_strided_slice %54 {offsets = [0, 0], sizes = [4, 32], strides = [1, 1]} : vector<4x96xf32> to vector<4x32xf32>
    %57 = arith.addf %55, %56 : vector<4x32xf32>
    %58 = arith.negf %57 : vector<4x32xf32>
    %59 = math.exp %58 : vector<4x32xf32>
    %cst_16 = arith.constant 1.000000e+00 : f32
    %60 = vector.broadcast %cst_16 : f32 to vector<4x32xf32>
    %61 = arith.addf %60, %59 : vector<4x32xf32>
    %62 = arith.divf %60, %61 : vector<4x32xf32>
    %63 = vector.extract_strided_slice %53 {offsets = [0, 32], sizes = [4, 32], strides = [1, 1]} : vector<4x96xf32> to vector<4x32xf32>
    %64 = vector.extract_strided_slice %54 {offsets = [0, 32], sizes = [4, 32], strides = [1, 1]} : vector<4x96xf32> to vector<4x32xf32>
    %65 = arith.addf %63, %64 : vector<4x32xf32>
    %66 = arith.negf %65 : vector<4x32xf32>
    %67 = math.exp %66 : vector<4x32xf32>
    %cst_17 = arith.constant 1.000000e+00 : f32
    %68 = vector.broadcast %cst_17 : f32 to vector<4x32xf32>
    %69 = arith.addf %68, %67 : vector<4x32xf32>
    %70 = arith.divf %68, %69 : vector<4x32xf32>
    %71 = vector.extract_strided_slice %53 {offsets = [0, 64], sizes = [4, 32], strides = [1, 1]} : vector<4x96xf32> to vector<4x32xf32>
    %72 = vector.extract_strided_slice %54 {offsets = [0, 64], sizes = [4, 32], strides = [1, 1]} : vector<4x96xf32> to vector<4x32xf32>
    %73 = arith.addf %72, %7 : vector<4x32xf32>
    %74 = arith.mulf %62, %73 : vector<4x32xf32>
    %75 = arith.addf %71, %74 : vector<4x32xf32>
    %76 = math.tanh %75 : vector<4x32xf32>
    %cst_18 = arith.constant 1.000000e+00 : f32
    %77 = vector.broadcast %cst_18 : f32 to vector<4x32xf32>
    %78 = arith.subf %77, %70 : vector<4x32xf32>
    %79 = arith.mulf %78, %76 : vector<4x32xf32>
    %80 = arith.mulf %70, %51 : vector<4x32xf32>
    %81 = arith.addf %79, %80 : vector<4x32xf32>
    %cst_19 = arith.constant 1.000000e+00 : f32
    %82 = vector.broadcast %cst_19 : f32 to vector<4x1xf32>
    %83 = arith.cmpf ogt, %11, %82 : vector<4x1xf32>
    %cst_20 = arith.constant 0.000000e+00 : f32
    %84 = vector.shape_cast %83 : vector<4x1xi1> to vector<4x1xi1>
    %85 = vector.broadcast %84 : vector<4x1xi1> to vector<4x32xi1>
    %86 = vector.broadcast %cst_20 : f32 to vector<4x32xf32>
    %87 = arith.select %85, %81, %86 : vector<4x32xi1>, vector<4x32xf32>
    %c4 = arith.constant 4 : index
    %c0_21 = arith.constant 0 : index
    %88 = vector.load %arg5[%c4, %c0_21] : memref<32x32xf32, #tpu.memory_space<vmem>>, vector<4x32xf32>
    tpu.vector_store %arg5[%c4, %c0_21], %87 {strides = array<i32>} : memref<32x32xf32, #tpu.memory_space<vmem>>, vector<4x32xf32>,
    %89 = vector.shape_cast %83 : vector<4x1xi1> to vector<4x1xi1>
    %90 = vector.broadcast %89 : vector<4x1xi1> to vector<4x32xi1>
    %91 = arith.select %90, %81, %51 : vector<4x32xi1>, vector<4x32xf32>
    %c2 = arith.constant 2 : index
    %c0_22 = arith.constant 0 : index
    %c0_23 = arith.constant 0 : index
    %92 = vector.load %arg1[%c2, %c0_22, %c0_23] : memref<8x4x96xf32, #tpu.memory_space<vmem>>, vector<1x4x96xf32>
    %93 = vector.shape_cast %92 : vector<1x4x96xf32> to vector<4x96xf32>
    %cst_24 = arith.constant dense<0.000000e+00> : vector<4x96xf32>
    %94 = tpu.matmul %91, %1, %cst_24 {dimension_numbers = #tpu.dot_dimension_numbers<[1], [0], [0], [1], [0, 0, 1, 1], [], []>} : vector<4x32xf32>, vector<32x96xf32>, vector<4x96xf32> -> vector<4x96xf32>
    %95 = vector.extract_strided_slice %93 {offsets = [0, 0], sizes = [4, 32], strides = [1, 1]} : vector<4x96xf32> to vector<4x32xf32>
    %96 = vector.extract_strided_slice %94 {offsets = [0, 0], sizes = [4, 32], strides = [1, 1]} : vector<4x96xf32> to vector<4x32xf32>
    %97 = arith.addf %95, %96 : vector<4x32xf32>
    %98 = arith.negf %97 : vector<4x32xf32>
    %99 = math.exp %98 : vector<4x32xf32>
    %cst_25 = arith.constant 1.000000e+00 : f32
    %100 = vector.broadcast %cst_25 : f32 to vector<4x32xf32>
    %101 = arith.addf %100, %99 : vector<4x32xf32>
    %102 = arith.divf %100, %101 : vector<4x32xf32>
    %103 = vector.extract_strided_slice %93 {offsets = [0, 32], sizes = [4, 32], strides = [1, 1]} : vector<4x96xf32> to vector<4x32xf32>
    %104 = vector.extract_strided_slice %94 {offsets = [0, 32], sizes = [4, 32], strides = [1, 1]} : vector<4x96xf32> to vector<4x32xf32>
    %105 = arith.addf %103, %104 : vector<4x32xf32>
    %106 = arith.negf %105 : vector<4x32xf32>
    %107 = math.exp %106 : vector<4x32xf32>
    %cst_26 = arith.constant 1.000000e+00 : f32
    %108 = vector.broadcast %cst_26 : f32 to vector<4x32xf32>
    %109 = arith.addf %108, %107 : vector<4x32xf32>
    %110 = arith.divf %108, %109 : vector<4x32xf32>
    %111 = vector.extract_strided_slice %93 {offsets = [0, 64], sizes = [4, 32], strides = [1, 1]} : vector<4x96xf32> to vector<4x32xf32>
    %112 = vector.extract_strided_slice %94 {offsets = [0, 64], sizes = [4, 32], strides = [1, 1]} : vector<4x96xf32> to vector<4x32xf32>
    %113 = arith.addf %112, %7 : vector<4x32xf32>
    %114 = arith.mulf %102, %113 : vector<4x32xf32>
    %115 = arith.addf %111, %114 : vector<4x32xf32>
    %116 = math.tanh %115 : vector<4x32xf32>
    %cst_27 = arith.constant 1.000000e+00 : f32
    %117 = vector.broadcast %cst_27 : f32 to vector<4x32xf32>
    %118 = arith.subf %117, %110 : vector<4x32xf32>
    %119 = arith.mulf %118, %116 : vector<4x32xf32>
    %120 = arith.mulf %110, %91 : vector<4x32xf32>
    %121 = arith.addf %119, %120 : vector<4x32xf32>
    %cst_28 = arith.constant 2.000000e+00 : f32
    %122 = vector.broadcast %cst_28 : f32 to vector<4x1xf32>
    %123 = arith.cmpf ogt, %11, %122 : vector<4x1xf32>
    %cst_29 = arith.constant 0.000000e+00 : f32
    %124 = vector.shape_cast %123 : vector<4x1xi1> to vector<4x1xi1>
    %125 = vector.broadcast %124 : vector<4x1xi1> to vector<4x32xi1>
    %126 = vector.broadcast %cst_29 : f32 to vector<4x32xf32>
    %127 = arith.select %125, %121, %126 : vector<4x32xi1>, vector<4x32xf32>
    %c8 = arith.constant 8 : index
    %c0_30 = arith.constant 0 : index
    %128 = vector.load %arg5[%c8, %c0_30] : memref<32x32xf32, #tpu.memory_space<vmem>>, vector<4x32xf32>
    tpu.vector_store %arg5[%c8, %c0_30], %127 {strides = array<i32>} : memref<32x32xf32, #tpu.memory_space<vmem>>, vector<4x32xf32>,
    %129 = vector.shape_cast %123 : vector<4x1xi1> to vector<4x1xi1>
    %130 = vector.broadcast %129 : vector<4x1xi1> to vector<4x32xi1>
    %131 = arith.select %130, %121, %91 : vector<4x32xi1>, vector<4x32xf32>
    %c3 = arith.constant 3 : index
    %c0_31 = arith.constant 0 : index
    %c0_32 = arith.constant 0 : index
    %132 = vector.load %arg1[%c3, %c0_31, %c0_32] : memref<8x4x96xf32, #tpu.memory_space<vmem>>, vector<1x4x96xf32>
    %133 = vector.shape_cast %132 : vector<1x4x96xf32> to vector<4x96xf32>
    %cst_33 = arith.constant dense<0.000000e+00> : vector<4x96xf32>
    %134 = tpu.matmul %131, %1, %cst_33 {dimension_numbers = #tpu.dot_dimension_numbers<[1], [0], [0], [1], [0, 0, 1, 1], [], []>} : vector<4x32xf32>, vector<32x96xf32>, vector<4x96xf32> -> vector<4x96xf32>
    %135 = vector.extract_strided_slice %133 {offsets = [0, 0], sizes = [4, 32], strides = [1, 1]} : vector<4x96xf32> to vector<4x32xf32>
    %136 = vector.extract_strided_slice %134 {offsets = [0, 0], sizes = [4, 32], strides = [1, 1]} : vector<4x96xf32> to vector<4x32xf32>
    %137 = arith.addf %135, %136 : vector<4x32xf32>
    %138 = arith.negf %137 : vector<4x32xf32>
    %139 = math.exp %138 : vector<4x32xf32>
    %cst_34 = arith.constant 1.000000e+00 : f32
    %140 = vector.broadcast %cst_34 : f32 to vector<4x32xf32>
    %141 = arith.addf %140, %139 : vector<4x32xf32>
    %142 = arith.divf %140, %141 : vector<4x32xf32>
    %143 = vector.extract_strided_slice %133 {offsets = [0, 32], sizes = [4, 32], strides = [1, 1]} : vector<4x96xf32> to vector<4x32xf32>
    %144 = vector.extract_strided_slice %134 {offsets = [0, 32], sizes = [4, 32], strides = [1, 1]} : vector<4x96xf32> to vector<4x32xf32>
    %145 = arith.addf %143, %144 : vector<4x32xf32>
    %146 = arith.negf %145 : vector<4x32xf32>
    %147 = math.exp %146 : vector<4x32xf32>
    %cst_35 = arith.constant 1.000000e+00 : f32
    %148 = vector.broadcast %cst_35 : f32 to vector<4x32xf32>
    %149 = arith.addf %148, %147 : vector<4x32xf32>
    %150 = arith.divf %148, %149 : vector<4x32xf32>
    %151 = vector.extract_strided_slice %133 {offsets = [0, 64], sizes = [4, 32], strides = [1, 1]} : vector<4x96xf32> to vector<4x32xf32>
    %152 = vector.extract_strided_slice %134 {offsets = [0, 64], sizes = [4, 32], strides = [1, 1]} : vector<4x96xf32> to vector<4x32xf32>
    %153 = arith.addf %152, %7 : vector<4x32xf32>
    %154 = arith.mulf %142, %153 : vector<4x32xf32>
    %155 = arith.addf %151, %154 : vector<4x32xf32>
    %156 = math.tanh %155 : vector<4x32xf32>
    %cst_36 = arith.constant 1.000000e+00 : f32
    %157 = vector.broadcast %cst_36 : f32 to vector<4x32xf32>
    %158 = arith.subf %157, %150 : vector<4x32xf32>
    %159 = arith.mulf %158, %156 : vector<4x32xf32>
    %160 = arith.mulf %150, %131 : vector<4x32xf32>
    %161 = arith.addf %159, %160 : vector<4x32xf32>
    %cst_37 = arith.constant 3.000000e+00 : f32
    %162 = vector.broadcast %cst_37 : f32 to vector<4x1xf32>
    %163 = arith.cmpf ogt, %11, %162 : vector<4x1xf32>
    %cst_38 = arith.constant 0.000000e+00 : f32
    %164 = vector.shape_cast %163 : vector<4x1xi1> to vector<4x1xi1>
    %165 = vector.broadcast %164 : vector<4x1xi1> to vector<4x32xi1>
    %166 = vector.broadcast %cst_38 : f32 to vector<4x32xf32>
    %167 = arith.select %165, %161, %166 : vector<4x32xi1>, vector<4x32xf32>
    %c12 = arith.constant 12 : index
    %c0_39 = arith.constant 0 : index
    %168 = vector.load %arg5[%c12, %c0_39] : memref<32x32xf32, #tpu.memory_space<vmem>>, vector<4x32xf32>
    tpu.vector_store %arg5[%c12, %c0_39], %167 {strides = array<i32>} : memref<32x32xf32, #tpu.memory_space<vmem>>, vector<4x32xf32>,
    %169 = vector.shape_cast %163 : vector<4x1xi1> to vector<4x1xi1>
    %170 = vector.broadcast %169 : vector<4x1xi1> to vector<4x32xi1>
    %171 = arith.select %170, %161, %131 : vector<4x32xi1>, vector<4x32xf32>
    %c4_40 = arith.constant 4 : index
    %c0_41 = arith.constant 0 : index
    %c0_42 = arith.constant 0 : index
    %172 = vector.load %arg1[%c4_40, %c0_41, %c0_42] : memref<8x4x96xf32, #tpu.memory_space<vmem>>, vector<1x4x96xf32>
    %173 = vector.shape_cast %172 : vector<1x4x96xf32> to vector<4x96xf32>
    %cst_43 = arith.constant dense<0.000000e+00> : vector<4x96xf32>
    %174 = tpu.matmul %171, %1, %cst_43 {dimension_numbers = #tpu.dot_dimension_numbers<[1], [0], [0], [1], [0, 0, 1, 1], [], []>} : vector<4x32xf32>, vector<32x96xf32>, vector<4x96xf32> -> vector<4x96xf32>
    %175 = vector.extract_strided_slice %173 {offsets = [0, 0], sizes = [4, 32], strides = [1, 1]} : vector<4x96xf32> to vector<4x32xf32>
    %176 = vector.extract_strided_slice %174 {offsets = [0, 0], sizes = [4, 32], strides = [1, 1]} : vector<4x96xf32> to vector<4x32xf32>
    %177 = arith.addf %175, %176 : vector<4x32xf32>
    %178 = arith.negf %177 : vector<4x32xf32>
    %179 = math.exp %178 : vector<4x32xf32>
    %cst_44 = arith.constant 1.000000e+00 : f32
    %180 = vector.broadcast %cst_44 : f32 to vector<4x32xf32>
    %181 = arith.addf %180, %179 : vector<4x32xf32>
    %182 = arith.divf %180, %181 : vector<4x32xf32>
    %183 = vector.extract_strided_slice %173 {offsets = [0, 32], sizes = [4, 32], strides = [1, 1]} : vector<4x96xf32> to vector<4x32xf32>
    %184 = vector.extract_strided_slice %174 {offsets = [0, 32], sizes = [4, 32], strides = [1, 1]} : vector<4x96xf32> to vector<4x32xf32>
    %185 = arith.addf %183, %184 : vector<4x32xf32>
    %186 = arith.negf %185 : vector<4x32xf32>
    %187 = math.exp %186 : vector<4x32xf32>
    %cst_45 = arith.constant 1.000000e+00 : f32
    %188 = vector.broadcast %cst_45 : f32 to vector<4x32xf32>
    %189 = arith.addf %188, %187 : vector<4x32xf32>
    %190 = arith.divf %188, %189 : vector<4x32xf32>
    %191 = vector.extract_strided_slice %173 {offsets = [0, 64], sizes = [4, 32], strides = [1, 1]} : vector<4x96xf32> to vector<4x32xf32>
    %192 = vector.extract_strided_slice %174 {offsets = [0, 64], sizes = [4, 32], strides = [1, 1]} : vector<4x96xf32> to vector<4x32xf32>
    %193 = arith.addf %192, %7 : vector<4x32xf32>
    %194 = arith.mulf %182, %193 : vector<4x32xf32>
    %195 = arith.addf %191, %194 : vector<4x32xf32>
    %196 = math.tanh %195 : vector<4x32xf32>
    %cst_46 = arith.constant 1.000000e+00 : f32
    %197 = vector.broadcast %cst_46 : f32 to vector<4x32xf32>
    %198 = arith.subf %197, %190 : vector<4x32xf32>
    %199 = arith.mulf %198, %196 : vector<4x32xf32>
    %200 = arith.mulf %190, %171 : vector<4x32xf32>
    %201 = arith.addf %199, %200 : vector<4x32xf32>
    %cst_47 = arith.constant 4.000000e+00 : f32
    %202 = vector.broadcast %cst_47 : f32 to vector<4x1xf32>
    %203 = arith.cmpf ogt, %11, %202 : vector<4x1xf32>
    %cst_48 = arith.constant 0.000000e+00 : f32
    %204 = vector.shape_cast %203 : vector<4x1xi1> to vector<4x1xi1>
    %205 = vector.broadcast %204 : vector<4x1xi1> to vector<4x32xi1>
    %206 = vector.broadcast %cst_48 : f32 to vector<4x32xf32>
    %207 = arith.select %205, %201, %206 : vector<4x32xi1>, vector<4x32xf32>
    %c16 = arith.constant 16 : index
    %c0_49 = arith.constant 0 : index
    %208 = vector.load %arg5[%c16, %c0_49] : memref<32x32xf32, #tpu.memory_space<vmem>>, vector<4x32xf32>
    tpu.vector_store %arg5[%c16, %c0_49], %207 {strides = array<i32>} : memref<32x32xf32, #tpu.memory_space<vmem>>, vector<4x32xf32>,
    %209 = vector.shape_cast %203 : vector<4x1xi1> to vector<4x1xi1>
    %210 = vector.broadcast %209 : vector<4x1xi1> to vector<4x32xi1>
    %211 = arith.select %210, %201, %171 : vector<4x32xi1>, vector<4x32xf32>
    %c5 = arith.constant 5 : index
    %c0_50 = arith.constant 0 : index
    %c0_51 = arith.constant 0 : index
    %212 = vector.load %arg1[%c5, %c0_50, %c0_51] : memref<8x4x96xf32, #tpu.memory_space<vmem>>, vector<1x4x96xf32>
    %213 = vector.shape_cast %212 : vector<1x4x96xf32> to vector<4x96xf32>
    %cst_52 = arith.constant dense<0.000000e+00> : vector<4x96xf32>
    %214 = tpu.matmul %211, %1, %cst_52 {dimension_numbers = #tpu.dot_dimension_numbers<[1], [0], [0], [1], [0, 0, 1, 1], [], []>} : vector<4x32xf32>, vector<32x96xf32>, vector<4x96xf32> -> vector<4x96xf32>
    %215 = vector.extract_strided_slice %213 {offsets = [0, 0], sizes = [4, 32], strides = [1, 1]} : vector<4x96xf32> to vector<4x32xf32>
    %216 = vector.extract_strided_slice %214 {offsets = [0, 0], sizes = [4, 32], strides = [1, 1]} : vector<4x96xf32> to vector<4x32xf32>
    %217 = arith.addf %215, %216 : vector<4x32xf32>
    %218 = arith.negf %217 : vector<4x32xf32>
    %219 = math.exp %218 : vector<4x32xf32>
    %cst_53 = arith.constant 1.000000e+00 : f32
    %220 = vector.broadcast %cst_53 : f32 to vector<4x32xf32>
    %221 = arith.addf %220, %219 : vector<4x32xf32>
    %222 = arith.divf %220, %221 : vector<4x32xf32>
    %223 = vector.extract_strided_slice %213 {offsets = [0, 32], sizes = [4, 32], strides = [1, 1]} : vector<4x96xf32> to vector<4x32xf32>
    %224 = vector.extract_strided_slice %214 {offsets = [0, 32], sizes = [4, 32], strides = [1, 1]} : vector<4x96xf32> to vector<4x32xf32>
    %225 = arith.addf %223, %224 : vector<4x32xf32>
    %226 = arith.negf %225 : vector<4x32xf32>
    %227 = math.exp %226 : vector<4x32xf32>
    %cst_54 = arith.constant 1.000000e+00 : f32
    %228 = vector.broadcast %cst_54 : f32 to vector<4x32xf32>
    %229 = arith.addf %228, %227 : vector<4x32xf32>
    %230 = arith.divf %228, %229 : vector<4x32xf32>
    %231 = vector.extract_strided_slice %213 {offsets = [0, 64], sizes = [4, 32], strides = [1, 1]} : vector<4x96xf32> to vector<4x32xf32>
    %232 = vector.extract_strided_slice %214 {offsets = [0, 64], sizes = [4, 32], strides = [1, 1]} : vector<4x96xf32> to vector<4x32xf32>
    %233 = arith.addf %232, %7 : vector<4x32xf32>
    %234 = arith.mulf %222, %233 : vector<4x32xf32>
    %235 = arith.addf %231, %234 : vector<4x32xf32>
    %236 = math.tanh %235 : vector<4x32xf32>
    %cst_55 = arith.constant 1.000000e+00 : f32
    %237 = vector.broadcast %cst_55 : f32 to vector<4x32xf32>
    %238 = arith.subf %237, %230 : vector<4x32xf32>
    %239 = arith.mulf %238, %236 : vector<4x32xf32>
    %240 = arith.mulf %230, %211 : vector<4x32xf32>
    %241 = arith.addf %239, %240 : vector<4x32xf32>
    %cst_56 = arith.constant 5.000000e+00 : f32
    %242 = vector.broadcast %cst_56 : f32 to vector<4x1xf32>
    %243 = arith.cmpf ogt, %11, %242 : vector<4x1xf32>
    %cst_57 = arith.constant 0.000000e+00 : f32
    %244 = vector.shape_cast %243 : vector<4x1xi1> to vector<4x1xi1>
    %245 = vector.broadcast %244 : vector<4x1xi1> to vector<4x32xi1>
    %246 = vector.broadcast %cst_57 : f32 to vector<4x32xf32>
    %247 = arith.select %245, %241, %246 : vector<4x32xi1>, vector<4x32xf32>
    %c20 = arith.constant 20 : index
    %c0_58 = arith.constant 0 : index
    %248 = vector.load %arg5[%c20, %c0_58] : memref<32x32xf32, #tpu.memory_space<vmem>>, vector<4x32xf32>
    tpu.vector_store %arg5[%c20, %c0_58], %247 {strides = array<i32>} : memref<32x32xf32, #tpu.memory_space<vmem>>, vector<4x32xf32>,
    %249 = vector.shape_cast %243 : vector<4x1xi1> to vector<4x1xi1>
    %250 = vector.broadcast %249 : vector<4x1xi1> to vector<4x32xi1>
    %251 = arith.select %250, %241, %211 : vector<4x32xi1>, vector<4x32xf32>
    %c6 = arith.constant 6 : index
    %c0_59 = arith.constant 0 : index
    %c0_60 = arith.constant 0 : index
    %252 = vector.load %arg1[%c6, %c0_59, %c0_60] : memref<8x4x96xf32, #tpu.memory_space<vmem>>, vector<1x4x96xf32>
    %253 = vector.shape_cast %252 : vector<1x4x96xf32> to vector<4x96xf32>
    %cst_61 = arith.constant dense<0.000000e+00> : vector<4x96xf32>
    %254 = tpu.matmul %251, %1, %cst_61 {dimension_numbers = #tpu.dot_dimension_numbers<[1], [0], [0], [1], [0, 0, 1, 1], [], []>} : vector<4x32xf32>, vector<32x96xf32>, vector<4x96xf32> -> vector<4x96xf32>
    %255 = vector.extract_strided_slice %253 {offsets = [0, 0], sizes = [4, 32], strides = [1, 1]} : vector<4x96xf32> to vector<4x32xf32>
    %256 = vector.extract_strided_slice %254 {offsets = [0, 0], sizes = [4, 32], strides = [1, 1]} : vector<4x96xf32> to vector<4x32xf32>
    %257 = arith.addf %255, %256 : vector<4x32xf32>
    %258 = arith.negf %257 : vector<4x32xf32>
    %259 = math.exp %258 : vector<4x32xf32>
    %cst_62 = arith.constant 1.000000e+00 : f32
    %260 = vector.broadcast %cst_62 : f32 to vector<4x32xf32>
    %261 = arith.addf %260, %259 : vector<4x32xf32>
    %262 = arith.divf %260, %261 : vector<4x32xf32>
    %263 = vector.extract_strided_slice %253 {offsets = [0, 32], sizes = [4, 32], strides = [1, 1]} : vector<4x96xf32> to vector<4x32xf32>
    %264 = vector.extract_strided_slice %254 {offsets = [0, 32], sizes = [4, 32], strides = [1, 1]} : vector<4x96xf32> to vector<4x32xf32>
    %265 = arith.addf %263, %264 : vector<4x32xf32>
    %266 = arith.negf %265 : vector<4x32xf32>
    %267 = math.exp %266 : vector<4x32xf32>
    %cst_63 = arith.constant 1.000000e+00 : f32
    %268 = vector.broadcast %cst_63 : f32 to vector<4x32xf32>
    %269 = arith.addf %268, %267 : vector<4x32xf32>
    %270 = arith.divf %268, %269 : vector<4x32xf32>
    %271 = vector.extract_strided_slice %253 {offsets = [0, 64], sizes = [4, 32], strides = [1, 1]} : vector<4x96xf32> to vector<4x32xf32>
    %272 = vector.extract_strided_slice %254 {offsets = [0, 64], sizes = [4, 32], strides = [1, 1]} : vector<4x96xf32> to vector<4x32xf32>
    %273 = arith.addf %272, %7 : vector<4x32xf32>
    %274 = arith.mulf %262, %273 : vector<4x32xf32>
    %275 = arith.addf %271, %274 : vector<4x32xf32>
    %276 = math.tanh %275 : vector<4x32xf32>
    %cst_64 = arith.constant 1.000000e+00 : f32
    %277 = vector.broadcast %cst_64 : f32 to vector<4x32xf32>
    %278 = arith.subf %277, %270 : vector<4x32xf32>
    %279 = arith.mulf %278, %276 : vector<4x32xf32>
    %280 = arith.mulf %270, %251 : vector<4x32xf32>
    %281 = arith.addf %279, %280 : vector<4x32xf32>
    %cst_65 = arith.constant 6.000000e+00 : f32
    %282 = vector.broadcast %cst_65 : f32 to vector<4x1xf32>
    %283 = arith.cmpf ogt, %11, %282 : vector<4x1xf32>
    %cst_66 = arith.constant 0.000000e+00 : f32
    %284 = vector.shape_cast %283 : vector<4x1xi1> to vector<4x1xi1>
    %285 = vector.broadcast %284 : vector<4x1xi1> to vector<4x32xi1>
    %286 = vector.broadcast %cst_66 : f32 to vector<4x32xf32>
    %287 = arith.select %285, %281, %286 : vector<4x32xi1>, vector<4x32xf32>
    %c24 = arith.constant 24 : index
    %c0_67 = arith.constant 0 : index
    %288 = vector.load %arg5[%c24, %c0_67] : memref<32x32xf32, #tpu.memory_space<vmem>>, vector<4x32xf32>
    tpu.vector_store %arg5[%c24, %c0_67], %287 {strides = array<i32>} : memref<32x32xf32, #tpu.memory_space<vmem>>, vector<4x32xf32>,
    %289 = vector.shape_cast %283 : vector<4x1xi1> to vector<4x1xi1>
    %290 = vector.broadcast %289 : vector<4x1xi1> to vector<4x32xi1>
    %291 = arith.select %290, %281, %251 : vector<4x32xi1>, vector<4x32xf32>
    %c7 = arith.constant 7 : index
    %c0_68 = arith.constant 0 : index
    %c0_69 = arith.constant 0 : index
    %292 = vector.load %arg1[%c7, %c0_68, %c0_69] : memref<8x4x96xf32, #tpu.memory_space<vmem>>, vector<1x4x96xf32>
    %293 = vector.shape_cast %292 : vector<1x4x96xf32> to vector<4x96xf32>
    %cst_70 = arith.constant dense<0.000000e+00> : vector<4x96xf32>
    %294 = tpu.matmul %291, %1, %cst_70 {dimension_numbers = #tpu.dot_dimension_numbers<[1], [0], [0], [1], [0, 0, 1, 1], [], []>} : vector<4x32xf32>, vector<32x96xf32>, vector<4x96xf32> -> vector<4x96xf32>
    %295 = vector.extract_strided_slice %293 {offsets = [0, 0], sizes = [4, 32], strides = [1, 1]} : vector<4x96xf32> to vector<4x32xf32>
    %296 = vector.extract_strided_slice %294 {offsets = [0, 0], sizes = [4, 32], strides = [1, 1]} : vector<4x96xf32> to vector<4x32xf32>
    %297 = arith.addf %295, %296 : vector<4x32xf32>
    %298 = arith.negf %297 : vector<4x32xf32>
    %299 = math.exp %298 : vector<4x32xf32>
    %cst_71 = arith.constant 1.000000e+00 : f32
    %300 = vector.broadcast %cst_71 : f32 to vector<4x32xf32>
    %301 = arith.addf %300, %299 : vector<4x32xf32>
    %302 = arith.divf %300, %301 : vector<4x32xf32>
    %303 = vector.extract_strided_slice %293 {offsets = [0, 32], sizes = [4, 32], strides = [1, 1]} : vector<4x96xf32> to vector<4x32xf32>
    %304 = vector.extract_strided_slice %294 {offsets = [0, 32], sizes = [4, 32], strides = [1, 1]} : vector<4x96xf32> to vector<4x32xf32>
    %305 = arith.addf %303, %304 : vector<4x32xf32>
    %306 = arith.negf %305 : vector<4x32xf32>
    %307 = math.exp %306 : vector<4x32xf32>
    %cst_72 = arith.constant 1.000000e+00 : f32
    %308 = vector.broadcast %cst_72 : f32 to vector<4x32xf32>
    %309 = arith.addf %308, %307 : vector<4x32xf32>
    %310 = arith.divf %308, %309 : vector<4x32xf32>
    %311 = vector.extract_strided_slice %293 {offsets = [0, 64], sizes = [4, 32], strides = [1, 1]} : vector<4x96xf32> to vector<4x32xf32>
    %312 = vector.extract_strided_slice %294 {offsets = [0, 64], sizes = [4, 32], strides = [1, 1]} : vector<4x96xf32> to vector<4x32xf32>
    %313 = arith.addf %312, %7 : vector<4x32xf32>
    %314 = arith.mulf %302, %313 : vector<4x32xf32>
    %315 = arith.addf %311, %314 : vector<4x32xf32>
    %316 = math.tanh %315 : vector<4x32xf32>
    %cst_73 = arith.constant 1.000000e+00 : f32
    %317 = vector.broadcast %cst_73 : f32 to vector<4x32xf32>
    %318 = arith.subf %317, %310 : vector<4x32xf32>
    %319 = arith.mulf %318, %316 : vector<4x32xf32>
    %320 = arith.mulf %310, %291 : vector<4x32xf32>
    %321 = arith.addf %319, %320 : vector<4x32xf32>
    %cst_74 = arith.constant 7.000000e+00 : f32
    %322 = vector.broadcast %cst_74 : f32 to vector<4x1xf32>
    %323 = arith.cmpf ogt, %11, %322 : vector<4x1xf32>
    %cst_75 = arith.constant 0.000000e+00 : f32
    %324 = vector.shape_cast %323 : vector<4x1xi1> to vector<4x1xi1>
    %325 = vector.broadcast %324 : vector<4x1xi1> to vector<4x32xi1>
    %326 = vector.broadcast %cst_75 : f32 to vector<4x32xf32>
    %327 = arith.select %325, %321, %326 : vector<4x32xi1>, vector<4x32xf32>
    %c28 = arith.constant 28 : index
    %c0_76 = arith.constant 0 : index
    %328 = vector.load %arg5[%c28, %c0_76] : memref<32x32xf32, #tpu.memory_space<vmem>>, vector<4x32xf32>
    tpu.vector_store %arg5[%c28, %c0_76], %327 {strides = array<i32>} : memref<32x32xf32, #tpu.memory_space<vmem>>, vector<4x32xf32>,
    %c0_77 = arith.constant 0 : index
    %c0_78 = arith.constant 0 : index
    %329 = vector.load %arg5[%c0_77, %c0_78] : memref<32x32xf32, #tpu.memory_space<vmem>>, vector<32x32xf32>
    %cst_79 = arith.constant dense<0.000000e+00> : vector<32x32xf32>
    %330 = tpu.matmul %329, %2, %cst_79 {dimension_numbers = #tpu.dot_dimension_numbers<[1], [0], [0], [1], [0, 0, 1, 1], [], []>} : vector<32x32xf32>, vector<32x32xf32>, vector<32x32xf32> -> vector<32x32xf32>
    %331 = vector.broadcast %8 : vector<1x32xf32> to vector<32x32xf32>
    %332 = arith.addf %330, %331 : vector<32x32xf32>
    %cst_80 = arith.constant dense<0.000000e+00> : vector<32x128xf32>
    %333 = tpu.matmul %332, %3, %cst_80 {dimension_numbers = #tpu.dot_dimension_numbers<[1], [0], [0], [1], [0, 0, 1, 1], [], []>} : vector<32x32xf32>, vector<32x128xf32>, vector<32x128xf32> -> vector<32x128xf32>
    %334 = vector.broadcast %9 : vector<1x128xf32> to vector<32x128xf32>
    %335 = arith.addf %333, %334 : vector<32x128xf32>
    %cst_81 = arith.constant dense<0xFF800000> : vector<32xf32>
    %336 = vector.multi_reduction <maximumf>, %335, %cst_81 [1] : vector<32x128xf32> to vector<32xf32>
    %337 = vector.shape_cast %336 : vector<32xf32> to vector<32x1xf32>
    %338 = vector.broadcast %337 : vector<32x1xf32> to vector<32x128xf32>
    %339 = arith.subf %335, %338 : vector<32x128xf32>
    %340 = math.exp %339 : vector<32x128xf32>
    %cst_82 = arith.constant dense<0.000000e+00> : vector<32xf32>
    %341 = vector.multi_reduction <add>, %340, %cst_82 [1] : vector<32x128xf32> to vector<32xf32>
    %342 = vector.shape_cast %341 : vector<32xf32> to vector<32x1xf32>
    %343 = math.log %342 : vector<32x1xf32>
    %344 = vector.broadcast %343 : vector<32x1xf32> to vector<32x128xf32>
    %345 = arith.subf %339, %344 : vector<32x128xf32>
    %c0_83 = arith.constant 0 : index
    %c0_84 = arith.constant 0 : index
    %346 = vector.load %arg4[%c0_83, %c0_84] : memref<32x128xf32, #tpu.memory_space<vmem>>, vector<32x128xf32>
    tpu.vector_store %arg4[%c0_83, %c0_84], %345 {strides = array<i32>} : memref<32x128xf32, #tpu.memory_space<vmem>>, vector<32x128xf32>,
    return
  }
  func.func @transform_0(%arg0: i32) -> (i32, i32, i32) {
    %c0_i32 = arith.constant 0 : i32
    %c0_i32_0 = arith.constant 0 : i32
    %c0_i32_1 = arith.constant 0 : i32
    %c0_i32_2 = arith.constant 0 : i32
    return %c0_i32, %c0_i32_0, %c0_i32_1 : i32, i32, i32
  }
  func.func @transform_1(%arg0: i32) -> (i32, i32) {
    %c0_i32 = arith.constant 0 : i32
    %c0_i32_0 = arith.constant 0 : i32
    %c0_i32_1 = arith.constant 0 : i32
    return %c0_i32, %c0_i32_0 : i32, i32
  }
  func.func @transform_2(%arg0: i32) -> (i32, i32) {
    %c0_i32 = arith.constant 0 : i32
    %c0_i32_0 = arith.constant 0 : i32
    %c0_i32_1 = arith.constant 0 : i32
    return %c0_i32, %c0_i32_0 : i32, i32
  }
  func.func @transform_3(%arg0: i32) -> (i32, i32) {
    %c0_i32 = arith.constant 0 : i32
    %c0_i32_0 = arith.constant 0 : i32
    %c0_i32_1 = arith.constant 0 : i32
    return %c0_i32, %c0_i32_0 : i32, i32
  }
}

</mosaic_0001>

<llo_original>
// kernel: rnn_decoder_forward.1
$region0: #{rnn_decoder_forward.1}
  #allocation0 [shape = 'u32[]', space=smem, size = 0x4, offset = 0x4, fixed_abs, tag = 'smem constant byte address 0x4 - core index']
  #allocation1 [shape = 'u32[144,128]{1,0:T(1,128)}', space=vmem, size = 0x12000, scoped, tag = 'internal scratch']
  #allocation2 [shape = 'f32[32,32]{1,0:T(8,128)}', space=vmem, size = 0x4000, scoped, tag = 'scratch operand']
  %s0 = inlined_call_operand.vmem [shape: f32[8,4,96], index: 0, kind: input, shape index: {}]
  %s1 = inlined_call_operand.vmem [shape: f32[32,256], index: 1, kind: input, shape index: {}]
  %s2 = inlined_call_operand.vmem [shape: f32[7,128], index: 2, kind: input, shape index: {}]
  %s3 = inlined_call_operand.vmem [shape: f32[32,128], index: 3, kind: output, shape index: {}]
  %s4 = sld [smem:[#allocation0]]
  $region22: #{rnn_decoder_forward.1} parent=0
    _
  %s6 = ssub.s32 1, %s4
  %s7 = scalar_select 0, %s6, %s4
  // Predicated region
  $region2: #{rnn_decoder_forward.1} parent=0 // pred_check
    _
  $region3: #{rnn_decoder_forward.1} parent=0 // pred_check_branch
    %9 = sbr.rel (0) target = $region5
  $region4: #{rnn_decoder_forward.1} parent=0 // pred_region
    _
  $region5: #{rnn_decoder_forward.1} parent=0 // pred_fallthru
    _
  // Predicated region
  $region6: #{rnn_decoder_forward.1} parent=0 // pred_check
    _
  $region7: #{rnn_decoder_forward.1} parent=0 // pred_check_branch
    %11 = sbr.rel (0) target = $region9
  $region8: #{rnn_decoder_forward.1} parent=0 // pred_region
    _
  $region9: #{rnn_decoder_forward.1} parent=0 // pred_fallthru
    _
  // Predicated region
  $region10: #{rnn_decoder_forward.1} parent=0 // pred_check
    _
  $region11: #{rnn_decoder_forward.1} parent=0 // pred_check_branch
    %13 = sbr.rel (0) target = $region13
  $region12: #{rnn_decoder_forward.1} parent=0 // pred_region
    _
  $region13: #{rnn_decoder_forward.1} parent=0 // pred_fallthru
    _
  %v14 = vld [vmem:[%s1] sm:$0xff]
  %v15 = vld [vmem:[%s1 + $0x8] sm:$0xff]
  %v16 = vld [vmem:[%s1 + $0x10] sm:$0xff]
  %v17 = vld [vmem:[%s1 + $0x18] sm:$0xff]
  %v18 = vld [vmem:[%s1 + $0x20] sm:$0xff]
  %v19 = vld [vmem:[%s1 + $0x28] sm:$0xff]
  %v20 = vld [vmem:[%s1 + $0x30] sm:$0xff]
  %v21 = vld [vmem:[%s1 + $0x38] sm:$0xff]
  %v22 = vld [vmem:[%s2] sm:$0x7f]
  %v23 = vlaneseq
  %v24 = vshrl.u32 %v23, 7
  %v25 = vsub.s32 0, %v24
  %v26 = vrot.slane %v22, %v25
  %v27 = vld [vmem:[%s0] sm:$0xf]
  %v29 = vrot.slane %v22, 3
  %vm30 = vcmask 261120
  %v31 = vsel %vm30, %v29, 0
  %33 = vmatprep.subr.mxu0 0.0
  %34 = vmatpush1.msra.mxu0 %v14
  %35 = vmatprep.subr.mxu0 0.0
  %36 = vmatpush1.msra.mxu0 %v16
  %37 = vmatprep.subr.mxu0 0.0
  %38 = vmatpush1.msra.mxu0 %v18
  %39 = vmatprep.subr.mxu0 0.0
  %40 = vmatpush1.msra.mxu0 %v20
  %41 = vmatprep.subr.mxu0 0.0
  %42 = vmatpush1.msra.mxu0 0.0
  %43 = vmatprep.subr.mxu0 0.0
  %44 = vmatpush1.msra.mxu0 0.0
  %45 = vmatprep.subr.mxu0 0.0
  %46 = vmatpush1.msra.mxu0 0.0
  %47 = vmatprep.subr.mxu0 0.0
  %48 = vmatpush1.msra.mxu0 0.0
  %49 = vmatprep.subr.mxu0 0.0
  %50 = vmatpush1.msra.mxu0 0.0
  %51 = vmatprep.subr.mxu0 0.0
  %52 = vmatpush1.msra.mxu0 0.0
  %53 = vmatprep.subr.mxu0 0.0
  %54 = vmatpush1.msra.mxu0 0.0
  %55 = vmatprep.subr.mxu0 0.0
  %56 = vmatpush1.msra.mxu0 0.0
  %57 = vmatprep.subr.mxu0 0.0
  %58 = vmatpush1.msra.mxu0 0.0
  %59 = vmatprep.subr.mxu0 0.0
  %60 = vmatpush1.msra.mxu0 0.0
  %61 = vmatprep.subr.mxu0 0.0
  %62 = vmatpush1.msra.mxu0 0.0
  %63 = vmatprep.subr.mxu0 0.0
  %64 = vmatpush1.msra.mxu0 0.0
  %65 = vmatprep.subr.mxu0 0.0
  %66 = vmatpush1.msra.mxu0 0.0
  %67 = vmatprep.subr.mxu0 0.0
  %68 = vmatpush1.msra.mxu0 0.0
  %69 = vmatprep.subr.mxu0 0.0
  %70 = vmatpush1.msra.mxu0 0.0
  %71 = vmatprep.subr.mxu0 0.0
  %72 = vmatpush1.msra.mxu0 0.0
  %73 = vmatprep.subr.mxu0 0.0
  %74 = vmatpush1.msra.mxu0 0.0
  %75 = vmatprep.subr.mxu0 0.0
  %76 = vmatpush1.msra.mxu0 0.0
  %77 = vmatprep.subr.mxu0 0.0
  %78 = vmatpush1.msra.mxu0 0.0
  %79 = vmatprep.subr.mxu0 0.0
  %80 = vmatpush1.msra.mxu0 0.0
  %81 = vmatprep.subr.mxu0 0.0
  %82 = vmatpush1.msra.mxu0 0.0
  %83 = vmatprep.subr.mxu0 0.0
  %84 = vmatpush1.msra.mxu0 0.0
  %85 = vmatprep.subr.mxu0 0.0
  %86 = vmatpush1.msra.mxu0 0.0
  %87 = vmatprep.subr.mxu0 0.0
  %88 = vmatpush1.msra.mxu0 0.0
  %89 = vmatprep.subr.mxu0 0.0
  %90 = vmatpush1.msra.mxu0 0.0
  %91 = vmatprep.subr.mxu0 0.0
  %92 = vmatpush1.msra.mxu0 0.0
  %93 = vmatprep.subr.mxu0 0.0
  %94 = vmatpush1.msra.mxu0 0.0
  %95 = vmatprep.subr.mxu0 0.0
  %96 = vmatpush1.msra.mxu0 0.0
  %97 = vmatprep.mubr.f32.mxu0 0.0
  %98 = vmatmul.mubr.f32.gmra.mrb[0].mxu0 %v31
  %v99 = vpop.f32.mrb[0].mxu0
  %v100 = vadd.f32 0.0, %v99
  %v101 = vpop.f32.mrb[0].mxu0
  %102 = vdwg.mxu0
  %v103 = vadd.f32 %v27, %v100
  %v104 = vxor.u32 %v103, 2147483648
  %v105 = vmul.f32 %v104, 1.442695
  %v106 = vpow.pop %v105
  %v107 = vadd.f32 %v106, 1.0
  %v108 = vrcp.pop %v107
  %v109 = vmul.f32 1.0, %v108
  %111 = vrot.lane.b32.xlu0 %v26, 64
  %v112 = vpop.permute.xlu0 %111
  %v114 = vadd.f32 %v100, %v112
  %116 = vrot.lane.b32.xlu0 %v114, 64
  %v117 = vpop.permute.xlu0 %116
  %v119 = vmul.f32 %v109, %v117
  %121 = vrot.lane.b32.xlu0 %v119, 64
  %v122 = vpop.permute.xlu0 %121
  %v124 = vadd.f32 %v27, %v122
  %v125 = vtanh.pop %v124
  %v126 = vsub.f32 1.0, %v109
  %128 = vrot.lane.b32.xlu0 %v125, 96
  %v129 = vpop.permute.xlu0 %128
  %v131 = vmul.f32 %v126, %v129
  %132 = vrot.lane.b32.xlu0 %v29, 32
  %v133 = vpop.permute.xlu0 %132
  %v135 = vmul.f32 %v109, %v133
  %v136 = vadd.f32 %v131, %v135
  %vm137 = vcmp.gt.f32.partialorder %v22, 0.0
  %v138 = vsel %vm137, 1, 0
  %139 = vset.pattern.permute.xlu0 32
  %140 = vperm.xlu0 %139, %v138
  %v141 = vpop.permute.xlu0 %140
  %vm142 = vcmp.eq.s32.totalorder %v141, 1
  %v144 = vrot.slane %v136, 5
  %145 = vrot.lane.b32.xlu0 %v144, 96
  %v146 = vpop.permute.xlu0 %145
  %v148 = vsel %vm142, %v146, 0.0
  %vm149 = vcmask 260099
  %150 = vst.msk [vmem:[#allocation2 - $0x3] sm:$0x78] %vm149, %v148
  %v151 = vsel %vm142, %v146, %v22
  %s152 = scalar_lea.vmem %s0, 4
  %v153 = vld [vmem:[%s152] sm:$0xf]
  %v155 = vrot.slane %v151, 3
  %v156 = vsel %vm30, %v155, 0
  %158 = vmatprep.subr.mxu0 0.0
  %159 = vmatpush1.msra.mxu0 %v14
  %160 = vmatprep.subr.mxu0 0.0
  %161 = vmatpush1.msra.mxu0 %v16
  %162 = vmatprep.subr.mxu0 0.0
  %163 = vmatpush1.msra.mxu0 %v18
  %164 = vmatprep.subr.mxu0 0.0
  %165 = vmatpush1.msra.mxu0 %v20
  %166 = vmatprep.subr.mxu0 0.0
  %167 = vmatpush1.msra.mxu0 0.0
  %168 = vmatprep.subr.mxu0 0.0
  %169 = vmatpush1.msra.mxu0 0.0
  %170 = vmatprep.subr.mxu0 0.0
  %171 = vmatpush1.msra.mxu0 0.0
  %172 = vmatprep.subr.mxu0 0.0
  %173 = vmatpush1.msra.mxu0 0.0
  %174 = vmatprep.subr.mxu0 0.0
  %175 = vmatpush1.msra.mxu0 0.0
  %176 = vmatprep.subr.mxu0 0.0
  %177 = vmatpush1.msra.mxu0 0.0
  %178 = vmatprep.subr.mxu0 0.0
  %179 = vmatpush1.msra.mxu0 0.0
  %180 = vmatprep.subr.mxu0 0.0
  %181 = vmatpush1.msra.mxu0 0.0
  %182 = vmatprep.subr.mxu0 0.0
  %183 = vmatpush1.msra.mxu0 0.0
  %184 = vmatprep.subr.mxu0 0.0
  %185 = vmatpush1.msra.mxu0 0.0
  %186 = vmatprep.subr.mxu0 0.0
  %187 = vmatpush1.msra.mxu0 0.0
  %188 = vmatprep.subr.mxu0 0.0
  %189 = vmatpush1.msra.mxu0 0.0
  %190 = vmatprep.subr.mxu0 0.0
  %191 = vmatpush1.msra.mxu0 0.0
  %192 = vmatprep.subr.mxu0 0.0
  %193 = vmatpush1.msra.mxu0 0.0
  %194 = vmatprep.subr.mxu0 0.0
  %195 = vmatpush1.msra.mxu0 0.0
  %196 = vmatprep.subr.mxu0 0.0
  %197 = vmatpush1.msra.mxu0 0.0
  %198 = vmatprep.subr.mxu0 0.0
  %199 = vmatpush1.msra.mxu0 0.0
  %200 = vmatprep.subr.mxu0 0.0
  %201 = vmatpush1.msra.mxu0 0.0
  %202 = vmatprep.subr.mxu0 0.0
  %203 = vmatpush1.msra.mxu0 0.0
  %204 = vmatprep.subr.mxu0 0.0
  %205 = vmatpush1.msra.mxu0 0.0
  %206 = vmatprep.subr.mxu0 0.0
  %207 = vmatpush1.msra.mxu0 0.0
  %208 = vmatprep.subr.mxu0 0.0
  %209 = vmatpush1.msra.mxu0 0.0
  %210 = vmatprep.subr.mxu0 0.0
  %211 = vmatpush1.msra.mxu0 0.0
  %212 = vmatprep.subr.mxu0 0.0
  %213 = vmatpush1.msra.mxu0 0.0
  %214 = vmatprep.subr.mxu0 0.0
  %215 = vmatpush1.msra.mxu0 0.0
  %216 = vmatprep.subr.mxu0 0.0
  %217 = vmatpush1.msra.mxu0 0.0
  %218 = vmatprep.subr.mxu0 0.0
  %219 = vmatpush1.msra.mxu0 0.0
  %220 = vmatprep.subr.mxu0 0.0
  %221 = vmatpush1.msra.mxu0 0.0
  %222 = vmatprep.mubr.f32.mxu0 0.0
  %223 = vmatmul.mubr.f32.gmra.mrb[0].mxu0 %v156
  %v224 = vpop.f32.mrb[0].mxu0
  %v225 = vadd.f32 0.0, %v224
  %v226 = vpop.f32.mrb[0].mxu0
  %227 = vdwg.mxu0
  %v228 = vadd.f32 %v153, %v225
  %v229 = vxor.u32 %v228, 2147483648
  %v230 = vmul.f32 %v229, 1.442695
  %v231 = vpow.pop %v230
  %v232 = vadd.f32 %v231, 1.0
  %v233 = vrcp.pop %v232
  %v234 = vmul.f32 1.0, %v233
  %v235 = vadd.f32 %v225, %v112
  %237 = vrot.lane.b32.xlu0 %v235, 64
  %v238 = vpop.permute.xlu0 %237
  %v240 = vmul.f32 %v234, %v238
  %242 = vrot.lane.b32.xlu0 %v240, 64
  %v243 = vpop.permute.xlu0 %242
  %v245 = vadd.f32 %v153, %v243
  %v246 = vtanh.pop %v245
  %v247 = vsub.f32 1.0, %v234
  %249 = vrot.lane.b32.xlu0 %v246, 96
  %v250 = vpop.permute.xlu0 %249
  %v252 = vmul.f32 %v247, %v250
  %253 = vrot.lane.b32.xlu0 %v155, 32
  %v254 = vpop.permute.xlu0 %253
  %v256 = vmul.f32 %v234, %v254
  %v257 = vadd.f32 %v252, %v256
  %vm258 = vcmp.gt.f32.partialorder %v22, 1.0
  %v259 = vsel %vm258, 1, 0
  %260 = vset.pattern.permute.xlu0 32
  %261 = vperm.xlu0 %260, %v259
  %v262 = vpop.permute.xlu0 %261
  %vm263 = vcmp.eq.s32.totalorder %v262, 1
  %v265 = vrot.slane %v257, 5
  %266 = vrot.lane.b32.xlu0 %v265, 96
  %v267 = vpop.permute.xlu0 %266
  %v269 = vsel %vm263, %v267, 0.0
  %270 = vst.msk [vmem:[#allocation2 + $0x1] sm:$0x78] %vm149, %v269
  %v271 = vsel %vm263, %v267, %v151
  %s272 = scalar_lea.vmem %s0, 8
  %v273 = vld [vmem:[%s272] sm:$0xf]
  %v275 = vrot.slane %v271, 3
  %v276 = vsel %vm30, %v275, 0
  %278 = vmatprep.subr.mxu0 0.0
  %279 = vmatpush1.msra.mxu0 %v14
  %280 = vmatprep.subr.mxu0 0.0
  %281 = vmatpush1.msra.mxu0 %v16
  %282 = vmatprep.subr.mxu0 0.0
  %283 = vmatpush1.msra.mxu0 %v18
  %284 = vmatprep.subr.mxu0 0.0
  %285 = vmatpush1.msra.mxu0 %v20
  %286 = vmatprep.subr.mxu0 0.0
  %287 = vmatpush1.msra.mxu0 0.0
  %288 = vmatprep.subr.mxu0 0.0
  %289 = vmatpush1.msra.mxu0 0.0
  %290 = vmatprep.subr.mxu0 0.0
  %291 = vmatpush1.msra.mxu0 0.0
  %292 = vmatprep.subr.mxu0 0.0
  %293 = vmatpush1.msra.mxu0 0.0
  %294 = vmatprep.subr.mxu0 0.0
  %295 = vmatpush1.msra.mxu0 0.0
  %296 = vmatprep.subr.mxu0 0.0
  %297 = vmatpush1.msra.mxu0 0.0
  %298 = vmatprep.subr.mxu0 0.0
  %299 = vmatpush1.msra.mxu0 0.0
  %300 = vmatprep.subr.mxu0 0.0
  %301 = vmatpush1.msra.mxu0 0.0
  %302 = vmatprep.subr.mxu0 0.0
  %303 = vmatpush1.msra.mxu0 0.0
  %304 = vmatprep.subr.mxu0 0.0
  %305 = vmatpush1.msra.mxu0 0.0
  %306 = vmatprep.subr.mxu0 0.0
  %307 = vmatpush1.msra.mxu0 0.0
  %308 = vmatprep.subr.mxu0 0.0
  %309 = vmatpush1.msra.mxu0 0.0
  %310 = vmatprep.subr.mxu0 0.0
  %311 = vmatpush1.msra.mxu0 0.0
  %312 = vmatprep.subr.mxu0 0.0
  %313 = vmatpush1.msra.mxu0 0.0
  %314 = vmatprep.subr.mxu0 0.0
  %315 = vmatpush1.msra.mxu0 0.0
  %316 = vmatprep.subr.mxu0 0.0
  %317 = vmatpush1.msra.mxu0 0.0
  %318 = vmatprep.subr.mxu0 0.0
  %319 = vmatpush1.msra.mxu0 0.0
  %320 = vmatprep.subr.mxu0 0.0
  %321 = vmatpush1.msra.mxu0 0.0
  %322 = vmatprep.subr.mxu0 0.0
  %323 = vmatpush1.msra.mxu0 0.0
  %324 = vmatprep.subr.mxu0 0.0
  %325 = vmatpush1.msra.mxu0 0.0
  %326 = vmatprep.subr.mxu0 0.0
  %327 = vmatpush1.msra.mxu0 0.0
  %328 = vmatprep.subr.mxu0 0.0
  %329 = vmatpush1.msra.mxu0 0.0
  %330 = vmatprep.subr.mxu0 0.0
  %331 = vmatpush1.msra.mxu0 0.0
  %332 = vmatprep.subr.mxu0 0.0
  %333 = vmatpush1.msra.mxu0 0.0
  %334 = vmatprep.subr.mxu0 0.0
  %335 = vmatpush1.msra.mxu0 0.0
  %336 = vmatprep.subr.mxu0 0.0
  %337 = vmatpush1.msra.mxu0 0.0
  %338 = vmatprep.subr.mxu0 0.0
  %339 = vmatpush1.msra.mxu0 0.0
  %340 = vmatprep.subr.mxu0 0.0
  %341 = vmatpush1.msra.mxu0 0.0
  %342 = vmatprep.mubr.f32.mxu0 0.0
  %343 = vmatmul.mubr.f32.gmra.mrb[0].mxu0 %v276
  %v344 = vpop.f32.mrb[0].mxu0
  %v345 = vadd.f32 0.0, %v344
  %v346 = vpop.f32.mrb[0].mxu0
  %347 = vdwg.mxu0
  %v348 = vadd.f32 %v273, %v345
  %v349 = vxor.u32 %v348, 2147483648
  %v350 = vmul.f32 %v349, 1.442695
  %v351 = vpow.pop %v350
  %v352 = vadd.f32 %v351, 1.0
  %v353 = vrcp.pop %v352
  %v354 = vmul.f32 1.0, %v353
  %v355 = vadd.f32 %v345, %v112
  %357 = vrot.lane.b32.xlu0 %v355, 64
  %v358 = vpop.permute.xlu0 %357
  %v360 = vmul.f32 %v354, %v358
  %362 = vrot.lane.b32.xlu0 %v360, 64
  %v363 = vpop.permute.xlu0 %362
  %v365 = vadd.f32 %v273, %v363
  %v366 = vtanh.pop %v365
  %v367 = vsub.f32 1.0, %v354
  %369 = vrot.lane.b32.xlu0 %v366, 96
  %v370 = vpop.permute.xlu0 %369
  %v372 = vmul.f32 %v367, %v370
  %373 = vrot.lane.b32.xlu0 %v275, 32
  %v374 = vpop.permute.xlu0 %373
  %v376 = vmul.f32 %v354, %v374
  %v377 = vadd.f32 %v372, %v376
  %vm378 = vcmp.gt.f32.partialorder %v22, 2.0
  %v379 = vsel %vm378, 1, 0
  %380 = vset.pattern.permute.xlu0 32
  %381 = vperm.xlu0 %380, %v379
  %v382 = vpop.permute.xlu0 %381
  %vm383 = vcmp.eq.s32.totalorder %v382, 1
  %v385 = vrot.slane %v377, 5
  %386 = vrot.lane.b32.xlu0 %v385, 96
  %v387 = vpop.permute.xlu0 %386
  %v389 = vsel %vm383, %v387, 0.0
  %390 = vst.msk [vmem:[#allocation2 + $0x5] sm:$0x78] %vm149, %v389
  %v391 = vsel %vm383, %v387, %v271
  %s392 = scalar_lea.vmem %s0, 12
  %v393 = vld [vmem:[%s392] sm:$0xf]
  %v395 = vrot.slane %v391, 3
  %v396 = vsel %vm30, %v395, 0
  %398 = vmatprep.subr.mxu0 0.0
  %399 = vmatpush1.msra.mxu0 %v14
  %400 = vmatprep.subr.mxu0 0.0
  %401 = vmatpush1.msra.mxu0 %v16
  %402 = vmatprep.subr.mxu0 0.0
  %403 = vmatpush1.msra.mxu0 %v18
  %404 = vmatprep.subr.mxu0 0.0
  %405 = vmatpush1.msra.mxu0 %v20
  %406 = vmatprep.subr.mxu0 0.0
  %407 = vmatpush1.msra.mxu0 0.0
  %408 = vmatprep.subr.mxu0 0.0
  %409 = vmatpush1.msra.mxu0 0.0
  %410 = vmatprep.subr.mxu0 0.0
  %411 = vmatpush1.msra.mxu0 0.0
  %412 = vmatprep.subr.mxu0 0.0
  %413 = vmatpush1.msra.mxu0 0.0
  %414 = vmatprep.subr.mxu0 0.0
  %415 = vmatpush1.msra.mxu0 0.0
  %416 = vmatprep.subr.mxu0 0.0
  %417 = vmatpush1.msra.mxu0 0.0
  %418 = vmatprep.subr.mxu0 0.0
  %419 = vmatpush1.msra.mxu0 0.0
  %420 = vmatprep.subr.mxu0 0.0
  %421 = vmatpush1.msra.mxu0 0.0
  %422 = vmatprep.subr.mxu0 0.0
  %423 = vmatpush1.msra.mxu0 0.0
  %424 = vmatprep.subr.mxu0 0.0
  %425 = vmatpush1.msra.mxu0 0.0
  %426 = vmatprep.subr.mxu0 0.0
  %427 = vmatpush1.msra.mxu0 0.0
  %428 = vmatprep.subr.mxu0 0.0
  %429 = vmatpush1.msra.mxu0 0.0
  %430 = vmatprep.subr.mxu0 0.0
  %431 = vmatpush1.msra.mxu0 0.0
  %432 = vmatprep.subr.mxu0 0.0
  %433 = vmatpush1.msra.mxu0 0.0
  %434 = vmatprep.subr.mxu0 0.0
  %435 = vmatpush1.msra.mxu0 0.0
  %436 = vmatprep.subr.mxu0 0.0
  %437 = vmatpush1.msra.mxu0 0.0
  %438 = vmatprep.subr.mxu0 0.0
  %439 = vmatpush1.msra.mxu0 0.0
  %440 = vmatprep.subr.mxu0 0.0
  %441 = vmatpush1.msra.mxu0 0.0
  %442 = vmatprep.subr.mxu0 0.0
  %443 = vmatpush1.msra.mxu0 0.0
  %444 = vmatprep.subr.mxu0 0.0
  %445 = vmatpush1.msra.mxu0 0.0
  %446 = vmatprep.subr.mxu0 0.0
  %447 = vmatpush1.msra.mxu0 0.0
  %448 = vmatprep.subr.mxu0 0.0
  %449 = vmatpush1.msra.mxu0 0.0
  %450 = vmatprep.subr.mxu0 0.0
  %451 = vmatpush1.msra.mxu0 0.0
  %452 = vmatprep.subr.mxu0 0.0
  %453 = vmatpush1.msra.mxu0 0.0
  %454 = vmatprep.subr.mxu0 0.0
  %455 = vmatpush1.msra.mxu0 0.0
  %456 = vmatprep.subr.mxu0 0.0
  %457 = vmatpush1.msra.mxu0 0.0
  %458 = vmatprep.subr.mxu0 0.0
  %459 = vmatpush1.msra.mxu0 0.0
  %460 = vmatprep.subr.mxu0 0.0
  %461 = vmatpush1.msra.mxu0 0.0
  %462 = vmatprep.mubr.f32.mxu0 0.0
  %463 = vmatmul.mubr.f32.gmra.mrb[0].mxu0 %v396
  %v464 = vpop.f32.mrb[0].mxu0
  %v465 = vadd.f32 0.0, %v464
  %v466 = vpop.f32.mrb[0].mxu0
  %467 = vdwg.mxu0
  %v468 = vadd.f32 %v393, %v465
  %v469 = vxor.u32 %v468, 2147483648
  %v470 = vmul.f32 %v469, 1.442695
  %v471 = vpow.pop %v470
  %v472 = vadd.f32 %v471, 1.0
  %v473 = vrcp.pop %v472
  %v474 = vmul.f32 1.0, %v473
  %v475 = vadd.f32 %v465, %v112
  %477 = vrot.lane.b32.xlu0 %v475, 64
  %v478 = vpop.permute.xlu0 %477
  %v480 = vmul.f32 %v474, %v478
  %482 = vrot.lane.b32.xlu0 %v480, 64
  %v483 = vpop.permute.xlu0 %482
  %v485 = vadd.f32 %v393, %v483
  %v486 = vtanh.pop %v485
  %v487 = vsub.f32 1.0, %v474
  %489 = vrot.lane.b32.xlu0 %v486, 96
  %v490 = vpop.permute.xlu0 %489
  %v492 = vmul.f32 %v487, %v490
  %493 = vrot.lane.b32.xlu0 %v395, 32
  %v494 = vpop.permute.xlu0 %493
  %v496 = vmul.f32 %v474, %v494
  %v497 = vadd.f32 %v492, %v496
  %vm498 = vcmp.gt.f32.partialorder %v22, 3.0
  %v499 = vsel %vm498, 1, 0
  %500 = vset.pattern.permute.xlu0 32
  %501 = vperm.xlu0 %500, %v499
  %v502 = vpop.permute.xlu0 %501
  %vm503 = vcmp.eq.s32.totalorder %v502, 1
  %v505 = vrot.slane %v497, 5
  %506 = vrot.lane.b32.xlu0 %v505, 96
  %v507 = vpop.permute.xlu0 %506
  %v509 = vsel %vm503, %v507, 0.0
  %510 = vst.msk [vmem:[#allocation2 + $0x9] sm:$0x78] %vm149, %v509
  %v511 = vsel %vm503, %v507, %v391
  %s512 = scalar_lea.vmem %s0, 16
  %v513 = vld [vmem:[%s512] sm:$0xf]
  %v515 = vrot.slane %v511, 3
  %v516 = vsel %vm30, %v515, 0
  %518 = vmatprep.subr.mxu0 0.0
  %519 = vmatpush1.msra.mxu0 %v14
  %520 = vmatprep.subr.mxu0 0.0
  %521 = vmatpush1.msra.mxu0 %v16
  %522 = vmatprep.subr.mxu0 0.0
  %523 = vmatpush1.msra.mxu0 %v18
  %524 = vmatprep.subr.mxu0 0.0
  %525 = vmatpush1.msra.mxu0 %v20
  %526 = vmatprep.subr.mxu0 0.0
  %527 = vmatpush1.msra.mxu0 0.0
  %528 = vmatprep.subr.mxu0 0.0
  %529 = vmatpush1.msra.mxu0 0.0
  %530 = vmatprep.subr.mxu0 0.0
  %531 = vmatpush1.msra.mxu0 0.0
  %532 = vmatprep.subr.mxu0 0.0
  %533 = vmatpush1.msra.mxu0 0.0
  %534 = vmatprep.subr.mxu0 0.0
  %535 = vmatpush1.msra.mxu0 0.0
  %536 = vmatprep.subr.mxu0 0.0
  %537 = vmatpush1.msra.mxu0 0.0
  %538 = vmatprep.subr.mxu0 0.0
  %539 = vmatpush1.msra.mxu0 0.0
  %540 = vmatprep.subr.mxu0 0.0
  %541 = vmatpush1.msra.mxu0 0.0
  %542 = vmatprep.subr.mxu0 0.0
  %543 = vmatpush1.msra.mxu0 0.0
  %544 = vmatprep.subr.mxu0 0.0
  %545 = vmatpush1.msra.mxu0 0.0
  %546 = vmatprep.subr.mxu0 0.0
  %547 = vmatpush1.msra.mxu0 0.0
  %548 = vmatprep.subr.mxu0 0.0
  %549 = vmatpush1.msra.mxu0 0.0
  %550 = vmatprep.subr.mxu0 0.0
  %551 = vmatpush1.msra.mxu0 0.0
  %552 = vmatprep.subr.mxu0 0.0
  %553 = vmatpush1.msra.mxu0 0.0
  %554 = vmatprep.subr.mxu0 0.0
  %555 = vmatpush1.msra.mxu0 0.0
  %556 = vmatprep.subr.mxu0 0.0
  %557 = vmatpush1.msra.mxu0 0.0
  %558 = vmatprep.subr.mxu0 0.0
  %559 = vmatpush1.msra.mxu0 0.0
  %560 = vmatprep.subr.mxu0 0.0
  %561 = vmatpush1.msra.mxu0 0.0
  %562 = vmatprep.subr.mxu0 0.0
  %563 = vmatpush1.msra.mxu0 0.0
  %564 = vmatprep.subr.mxu0 0.0
  %565 = vmatpush1.msra.mxu0 0.0
  %566 = vmatprep.subr.mxu0 0.0
  %567 = vmatpush1.msra.mxu0 0.0
  %568 = vmatprep.subr.mxu0 0.0
  %569 = vmatpush1.msra.mxu0 0.0
  %570 = vmatprep.subr.mxu0 0.0
  %571 = vmatpush1.msra.mxu0 0.0
  %572 = vmatprep.subr.mxu0 0.0
  %573 = vmatpush1.msra.mxu0 0.0
  %574 = vmatprep.subr.mxu0 0.0
  %575 = vmatpush1.msra.mxu0 0.0
  %576 = vmatprep.subr.mxu0 0.0
  %577 = vmatpush1.msra.mxu0 0.0
  %578 = vmatprep.subr.mxu0 0.0
  %579 = vmatpush1.msra.mxu0 0.0
  %580 = vmatprep.subr.mxu0 0.0
  %581 = vmatpush1.msra.mxu0 0.0
  %582 = vmatprep.mubr.f32.mxu0 0.0
  %583 = vmatmul.mubr.f32.gmra.mrb[0].mxu0 %v516
  %v584 = vpop.f32.mrb[0].mxu0
  %v585 = vadd.f32 0.0, %v584
  %v586 = vpop.f32.mrb[0].mxu0
  %587 = vdwg.mxu0
  %v588 = vadd.f32 %v513, %v585
  %v589 = vxor.u32 %v588, 2147483648
  %v590 = vmul.f32 %v589, 1.442695
  %v591 = vpow.pop %v590
  %v592 = vadd.f32 %v591, 1.0
  %v593 = vrcp.pop %v592
  %v594 = vmul.f32 1.0, %v593
  %v595 = vadd.f32 %v585, %v112
  %597 = vrot.lane.b32.xlu0 %v595, 64
  %v598 = vpop.permute.xlu0 %597
  %v600 = vmul.f32 %v594, %v598
  %602 = vrot.lane.b32.xlu0 %v600, 64
  %v603 = vpop.permute.xlu0 %602
  %v605 = vadd.f32 %v513, %v603
  %v606 = vtanh.pop %v605
  %v607 = vsub.f32 1.0, %v594
  %609 = vrot.lane.b32.xlu0 %v606, 96
  %v610 = vpop.permute.xlu0 %609
  %v612 = vmul.f32 %v607, %v610
  %613 = vrot.lane.b32.xlu0 %v515, 32
  %v614 = vpop.permute.xlu0 %613
  %v616 = vmul.f32 %v594, %v614
  %v617 = vadd.f32 %v612, %v616
  %vm618 = vcmp.gt.f32.partialorder %v22, 4.0
  %v619 = vsel %vm618, 1, 0
  %620 = vset.pattern.permute.xlu0 32
  %621 = vperm.xlu0 %620, %v619
  %v622 = vpop.permute.xlu0 %621
  %vm623 = vcmp.eq.s32.totalorder %v622, 1
  %v625 = vrot.slane %v617, 5
  %626 = vrot.lane.b32.xlu0 %v625, 96
  %v627 = vpop.permute.xlu0 %626
  %v629 = vsel %vm623, %v627, 0.0
  %630 = vst.msk [vmem:[#allocation2 + $0xd] sm:$0x78] %vm149, %v629
  %v631 = vsel %vm623, %v627, %v511
  %s632 = scalar_lea.vmem %s0, 20
  %v633 = vld [vmem:[%s632] sm:$0xf]
  %v635 = vrot.slane %v631, 3
  %v636 = vsel %vm30, %v635, 0
  %638 = vmatprep.subr.mxu0 0.0
  %639 = vmatpush1.msra.mxu0 %v14
  %640 = vmatprep.subr.mxu0 0.0
  %641 = vmatpush1.msra.mxu0 %v16
  %642 = vmatprep.subr.mxu0 0.0
  %643 = vmatpush1.msra.mxu0 %v18
  %644 = vmatprep.subr.mxu0 0.0
  %645 = vmatpush1.msra.mxu0 %v20
  %646 = vmatprep.subr.mxu0 0.0
  %647 = vmatpush1.msra.mxu0 0.0
  %648 = vmatprep.subr.mxu0 0.0
  %649 = vmatpush1.msra.mxu0 0.0
  %650 = vmatprep.subr.mxu0 0.0
  %651 = vmatpush1.msra.mxu0 0.0
  %652 = vmatprep.subr.mxu0 0.0
  %653 = vmatpush1.msra.mxu0 0.0
  %654 = vmatprep.subr.mxu0 0.0
  %655 = vmatpush1.msra.mxu0 0.0
  %656 = vmatprep.subr.mxu0 0.0
  %657 = vmatpush1.msra.mxu0 0.0
  %658 = vmatprep.subr.mxu0 0.0
  %659 = vmatpush1.msra.mxu0 0.0
  %660 = vmatprep.subr.mxu0 0.0
  %661 = vmatpush1.msra.mxu0 0.0
  %662 = vmatprep.subr.mxu0 0.0
  %663 = vmatpush1.msra.mxu0 0.0
  %664 = vmatprep.subr.mxu0 0.0
  %665 = vmatpush1.msra.mxu0 0.0
  %666 = vmatprep.subr.mxu0 0.0
  %667 = vmatpush1.msra.mxu0 0.0
  %668 = vmatprep.subr.mxu0 0.0
  %669 = vmatpush1.msra.mxu0 0.0
  %670 = vmatprep.subr.mxu0 0.0
  %671 = vmatpush1.msra.mxu0 0.0
  %672 = vmatprep.subr.mxu0 0.0
  %673 = vmatpush1.msra.mxu0 0.0
  %674 = vmatprep.subr.mxu0 0.0
  %675 = vmatpush1.msra.mxu0 0.0
  %676 = vmatprep.subr.mxu0 0.0
  %677 = vmatpush1.msra.mxu0 0.0
  %678 = vmatprep.subr.mxu0 0.0
  %679 = vmatpush1.msra.mxu0 0.0
  %680 = vmatprep.subr.mxu0 0.0
  %681 = vmatpush1.msra.mxu0 0.0
  %682 = vmatprep.subr.mxu0 0.0
  %683 = vmatpush1.msra.mxu0 0.0
  %684 = vmatprep.subr.mxu0 0.0
  %685 = vmatpush1.msra.mxu0 0.0
  %686 = vmatprep.subr.mxu0 0.0
  %687 = vmatpush1.msra.mxu0 0.0
  %688 = vmatprep.subr.mxu0 0.0
  %689 = vmatpush1.msra.mxu0 0.0
  %690 = vmatprep.subr.mxu0 0.0
  %691 = vmatpush1.msra.mxu0 0.0
  %692 = vmatprep.subr.mxu0 0.0
  %693 = vmatpush1.msra.mxu0 0.0
  %694 = vmatprep.subr.mxu0 0.0
  %695 = vmatpush1.msra.mxu0 0.0
  %696 = vmatprep.subr.mxu0 0.0
  %697 = vmatpush1.msra.mxu0 0.0
  %698 = vmatprep.subr.mxu0 0.0
  %699 = vmatpush1.msra.mxu0 0.0
  %700 = vmatprep.subr.mxu0 0.0
  %701 = vmatpush1.msra.mxu0 0.0
  %702 = vmatprep.mubr.f32.mxu0 0.0
  %703 = vmatmul.mubr.f32.gmra.mrb[0].mxu0 %v636
  %v704 = vpop.f32.mrb[0].mxu0
  %v705 = vadd.f32 0.0, %v704
  %v706 = vpop.f32.mrb[0].mxu0
  %707 = vdwg.mxu0
  %v708 = vadd.f32 %v633, %v705
  %v709 = vxor.u32 %v708, 2147483648
  %v710 = vmul.f32 %v709, 1.442695
  %v711 = vpow.pop %v710
  %v712 = vadd.f32 %v711, 1.0
  %v713 = vrcp.pop %v712
  %v714 = vmul.f32 1.0, %v713
  %v715 = vadd.f32 %v705, %v112
  %717 = vrot.lane.b32.xlu0 %v715, 64
  %v718 = vpop.permute.xlu0 %717
  %v720 = vmul.f32 %v714, %v718
  %722 = vrot.lane.b32.xlu0 %v720, 64
  %v723 = vpop.permute.xlu0 %722
  %v725 = vadd.f32 %v633, %v723
  %v726 = vtanh.pop %v725
  %v727 = vsub.f32 1.0, %v714
  %729 = vrot.lane.b32.xlu0 %v726, 96
  %v730 = vpop.permute.xlu0 %729
  %v732 = vmul.f32 %v727, %v730
  %733 = vrot.lane.b32.xlu0 %v635, 32
  %v734 = vpop.permute.xlu0 %733
  %v736 = vmul.f32 %v714, %v734
  %v737 = vadd.f32 %v732, %v736
  %vm738 = vcmp.gt.f32.partialorder %v22, 5.0
  %v739 = vsel %vm738, 1, 0
  %740 = vset.pattern.permute.xlu0 32
  %741 = vperm.xlu0 %740, %v739
  %v742 = vpop.permute.xlu0 %741
  %vm743 = vcmp.eq.s32.totalorder %v742, 1
  %v745 = vrot.slane %v737, 5
  %746 = vrot.lane.b32.xlu0 %v745, 96
  %v747 = vpop.permute.xlu0 %746
  %v749 = vsel %vm743, %v747, 0.0
  %750 = vst.msk [vmem:[#allocation2 + $0x11] sm:$0x78] %vm149, %v749
  %v751 = vsel %vm743, %v747, %v631
  %s752 = scalar_lea.vmem %s0, 24
  %v753 = vld [vmem:[%s752] sm:$0xf]
  %v755 = vrot.slane %v751, 3
  %v756 = vsel %vm30, %v755, 0
  %758 = vmatprep.subr.mxu0 0.0
  %759 = vmatpush1.msra.mxu0 %v14
  %760 = vmatprep.subr.mxu0 0.0
  %761 = vmatpush1.msra.mxu0 %v16
  %762 = vmatprep.subr.mxu0 0.0
  %763 = vmatpush1.msra.mxu0 %v18
  %764 = vmatprep.subr.mxu0 0.0
  %765 = vmatpush1.msra.mxu0 %v20
  %766 = vmatprep.subr.mxu0 0.0
  %767 = vmatpush1.msra.mxu0 0.0
  %768 = vmatprep.subr.mxu0 0.0
  %769 = vmatpush1.msra.mxu0 0.0
  %770 = vmatprep.subr.mxu0 0.0
  %771 = vmatpush1.msra.mxu0 0.0
  %772 = vmatprep.subr.mxu0 0.0
  %773 = vmatpush1.msra.mxu0 0.0
  %774 = vmatprep.subr.mxu0 0.0
  %775 = vmatpush1.msra.mxu0 0.0
  %776 = vmatprep.subr.mxu0 0.0
  %777 = vmatpush1.msra.mxu0 0.0
  %778 = vmatprep.subr.mxu0 0.0
  %779 = vmatpush1.msra.mxu0 0.0
  %780 = vmatprep.subr.mxu0 0.0
  %781 = vmatpush1.msra.mxu0 0.0
  %782 = vmatprep.subr.mxu0 0.0
  %783 = vmatpush1.msra.mxu0 0.0
  %784 = vmatprep.subr.mxu0 0.0
  %785 = vmatpush1.msra.mxu0 0.0
  %786 = vmatprep.subr.mxu0 0.0
  %787 = vmatpush1.msra.mxu0 0.0
  %788 = vmatprep.subr.mxu0 0.0
  %789 = vmatpush1.msra.mxu0 0.0
  %790 = vmatprep.subr.mxu0 0.0
  %791 = vmatpush1.msra.mxu0 0.0
  %792 = vmatprep.subr.mxu0 0.0
  %793 = vmatpush1.msra.mxu0 0.0
  %794 = vmatprep.subr.mxu0 0.0
  %795 = vmatpush1.msra.mxu0 0.0
  %796 = vmatprep.subr.mxu0 0.0
  %797 = vmatpush1.msra.mxu0 0.0
  %798 = vmatprep.subr.mxu0 0.0
  %799 = vmatpush1.msra.mxu0 0.0
  %800 = vmatprep.subr.mxu0 0.0
  %801 = vmatpush1.msra.mxu0 0.0
  %802 = vmatprep.subr.mxu0 0.0
  %803 = vmatpush1.msra.mxu0 0.0
  %804 = vmatprep.subr.mxu0 0.0
  %805 = vmatpush1.msra.mxu0 0.0
  %806 = vmatprep.subr.mxu0 0.0
  %807 = vmatpush1.msra.mxu0 0.0
  %808 = vmatprep.subr.mxu0 0.0
  %809 = vmatpush1.msra.mxu0 0.0
  %810 = vmatprep.subr.mxu0 0.0
  %811 = vmatpush1.msra.mxu0 0.0
  %812 = vmatprep.subr.mxu0 0.0
  %813 = vmatpush1.msra.mxu0 0.0
  %814 = vmatprep.subr.mxu0 0.0
  %815 = vmatpush1.msra.mxu0 0.0
  %816 = vmatprep.subr.mxu0 0.0
  %817 = vmatpush1.msra.mxu0 0.0
  %818 = vmatprep.subr.mxu0 0.0
  %819 = vmatpush1.msra.mxu0 0.0
  %820 = vmatprep.subr.mxu0 0.0
  %821 = vmatpush1.msra.mxu0 0.0
  %822 = vmatprep.mubr.f32.mxu0 0.0
  %823 = vmatmul.mubr.f32.gmra.mrb[0].mxu0 %v756
  %v824 = vpop.f32.mrb[0].mxu0
  %v825 = vadd.f32 0.0, %v824
  %v826 = vpop.f32.mrb[0].mxu0
  %827 = vdwg.mxu0
  %v828 = vadd.f32 %v753, %v825
  %v829 = vxor.u32 %v828, 2147483648
  %v830 = vmul.f32 %v829, 1.442695
  %v831 = vpow.pop %v830
  %v832 = vadd.f32 %v831, 1.0
  %v833 = vrcp.pop %v832
  %v834 = vmul.f32 1.0, %v833
  %v835 = vadd.f32 %v825, %v112
  %837 = vrot.lane.b32.xlu0 %v835, 64
  %v838 = vpop.permute.xlu0 %837
  %v840 = vmul.f32 %v834, %v838
  %842 = vrot.lane.b32.xlu0 %v840, 64
  %v843 = vpop.permute.xlu0 %842
  %v845 = vadd.f32 %v753, %v843
  %v846 = vtanh.pop %v845
  %v847 = vsub.f32 1.0, %v834
  %849 = vrot.lane.b32.xlu0 %v846, 96
  %v850 = vpop.permute.xlu0 %849
  %v852 = vmul.f32 %v847, %v850
  %853 = vrot.lane.b32.xlu0 %v755, 32
  %v854 = vpop.permute.xlu0 %853
  %v856 = vmul.f32 %v834, %v854
  %v857 = vadd.f32 %v852, %v856
  %vm858 = vcmp.gt.f32.partialorder %v22, 6.0
  %v859 = vsel %vm858, 1, 0
  %860 = vset.pattern.permute.xlu0 32
  %861 = vperm.xlu0 %860, %v859
  %v862 = vpop.permute.xlu0 %861
  %vm863 = vcmp.eq.s32.totalorder %v862, 1
  %v865 = vrot.slane %v857, 5
  %866 = vrot.lane.b32.xlu0 %v865, 96
  %v867 = vpop.permute.xlu0 %866
  %v869 = vsel %vm863, %v867, 0.0
  %870 = vst.msk [vmem:[#allocation2 + $0x15] sm:$0x78] %vm149, %v869
  %v871 = vsel %vm863, %v867, %v751
  %s872 = scalar_lea.vmem %s0, 28
  %v873 = vld [vmem:[%s872] sm:$0xf]
  %v875 = vrot.slane %v871, 3
  %v876 = vsel %vm30, %v875, 0
  %878 = vmatprep.subr.mxu0 0.0
  %879 = vmatpush1.msra.mxu0 %v14
  %880 = vmatprep.subr.mxu0 0.0
  %881 = vmatpush1.msra.mxu0 %v16
  %882 = vmatprep.subr.mxu0 0.0
  %883 = vmatpush1.msra.mxu0 %v18
  %884 = vmatprep.subr.mxu0 0.0
  %885 = vmatpush1.msra.mxu0 %v20
  %886 = vmatprep.subr.mxu0 0.0
  %887 = vmatpush1.msra.mxu0 0.0
  %888 = vmatprep.subr.mxu0 0.0
  %889 = vmatpush1.msra.mxu0 0.0
  %890 = vmatprep.subr.mxu0 0.0
  %891 = vmatpush1.msra.mxu0 0.0
  %892 = vmatprep.subr.mxu0 0.0
  %893 = vmatpush1.msra.mxu0 0.0
  %894 = vmatprep.subr.mxu0 0.0
  %895 = vmatpush1.msra.mxu0 0.0
  %896 = vmatprep.subr.mxu0 0.0
  %897 = vmatpush1.msra.mxu0 0.0
  %898 = vmatprep.subr.mxu0 0.0
  %899 = vmatpush1.msra.mxu0 0.0
  %900 = vmatprep.subr.mxu0 0.0
  %901 = vmatpush1.msra.mxu0 0.0
  %902 = vmatprep.subr.mxu0 0.0
  %903 = vmatpush1.msra.mxu0 0.0
  %904 = vmatprep.subr.mxu0 0.0
  %905 = vmatpush1.msra.mxu0 0.0
  %906 = vmatprep.subr.mxu0 0.0
  %907 = vmatpush1.msra.mxu0 0.0
  %908 = vmatprep.subr.mxu0 0.0
  %909 = vmatpush1.msra.mxu0 0.0
  %910 = vmatprep.subr.mxu0 0.0
  %911 = vmatpush1.msra.mxu0 0.0
  %912 = vmatprep.subr.mxu0 0.0
  %913 = vmatpush1.msra.mxu0 0.0
  %914 = vmatprep.subr.mxu0 0.0
  %915 = vmatpush1.msra.mxu0 0.0
  %916 = vmatprep.subr.mxu0 0.0
  %917 = vmatpush1.msra.mxu0 0.0
  %918 = vmatprep.subr.mxu0 0.0
  %919 = vmatpush1.msra.mxu0 0.0
  %920 = vmatprep.subr.mxu0 0.0
  %921 = vmatpush1.msra.mxu0 0.0
  %922 = vmatprep.subr.mxu0 0.0
  %923 = vmatpush1.msra.mxu0 0.0
  %924 = vmatprep.subr.mxu0 0.0
  %925 = vmatpush1.msra.mxu0 0.0
  %926 = vmatprep.subr.mxu0 0.0
  %927 = vmatpush1.msra.mxu0 0.0
  %928 = vmatprep.subr.mxu0 0.0
  %929 = vmatpush1.msra.mxu0 0.0
  %930 = vmatprep.subr.mxu0 0.0
  %931 = vmatpush1.msra.mxu0 0.0
  %932 = vmatprep.subr.mxu0 0.0
  %933 = vmatpush1.msra.mxu0 0.0
  %934 = vmatprep.subr.mxu0 0.0
  %935 = vmatpush1.msra.mxu0 0.0
  %936 = vmatprep.subr.mxu0 0.0
  %937 = vmatpush1.msra.mxu0 0.0
  %938 = vmatprep.subr.mxu0 0.0
  %939 = vmatpush1.msra.mxu0 0.0
  %940 = vmatprep.subr.mxu0 0.0
  %941 = vmatpush1.msra.mxu0 0.0
  %942 = vmatprep.mubr.f32.mxu0 0.0
  %943 = vmatmul.mubr.f32.gmra.mrb[0].mxu0 %v876
  %v944 = vpop.f32.mrb[0].mxu0
  %v945 = vadd.f32 0.0, %v944
  %v946 = vpop.f32.mrb[0].mxu0
  %947 = vdwg.mxu0
  %v948 = vadd.f32 %v873, %v945
  %v949 = vxor.u32 %v948, 2147483648
  %v950 = vmul.f32 %v949, 1.442695
  %v951 = vpow.pop %v950
  %v952 = vadd.f32 %v951, 1.0
  %v953 = vrcp.pop %v952
  %v954 = vmul.f32 1.0, %v953
  %v955 = vadd.f32 %v945, %v112
  %957 = vrot.lane.b32.xlu0 %v955, 64
  %v958 = vpop.permute.xlu0 %957
  %v960 = vmul.f32 %v954, %v958
  %962 = vrot.lane.b32.xlu0 %v960, 64
  %v963 = vpop.permute.xlu0 %962
  %v965 = vadd.f32 %v873, %v963
  %v966 = vtanh.pop %v965
  %v967 = vsub.f32 1.0, %v954
  %969 = vrot.lane.b32.xlu0 %v966, 96
  %v970 = vpop.permute.xlu0 %969
  %v972 = vmul.f32 %v967, %v970
  %973 = vrot.lane.b32.xlu0 %v875, 32
  %v974 = vpop.permute.xlu0 %973
  %v976 = vmul.f32 %v954, %v974
  %v977 = vadd.f32 %v972, %v976
  %vm978 = vcmp.gt.f32.partialorder %v22, 7.0
  %v979 = vsel %vm978, 1, 0
  %980 = vset.pattern.permute.xlu0 32
  %981 = vperm.xlu0 %980, %v979
  %v982 = vpop.permute.xlu0 %981
  %vm983 = vcmp.eq.s32.totalorder %v982, 1
  %v985 = vrot.slane %v977, 5
  %986 = vrot.lane.b32.xlu0 %v985, 96
  %v987 = vpop.permute.xlu0 %986
  %v989 = vsel %vm983, %v987, 0.0
  %990 = vst.msk [vmem:[#allocation2 + $0x19] sm:$0x78] %vm149, %v989
  %v991 = vld [vmem:[#allocation2] sm:$0xff]
  %v992 = vld [vmem:[#allocation2 + $0x8] sm:$0xff]
  %v993 = vld [vmem:[#allocation2 + $0x10] sm:$0xff]
  %v994 = vld [vmem:[#allocation2 + $0x18] sm:$0xff]
  %v995 = vlaneseq
  %v996 = vshrl.u32 %v995, 7
  %v997 = vsub.s32 1, %v996
  %v998 = vrot.slane %v22, %v997
  %1003 = vrot.lane.b32.xlu0 %v14, 32
  %v1004 = vpop.permute.xlu0 %1003
  %1005 = vrot.lane.b32.xlu0 %v16, 32
  %v1006 = vpop.permute.xlu0 %1005
  %1007 = vrot.lane.b32.xlu0 %v18, 32
  %v1008 = vpop.permute.xlu0 %1007
  %1009 = vrot.lane.b32.xlu0 %v20, 32
  %v1010 = vpop.permute.xlu0 %1009
  %v1016 = vsel %vm30, %v991, 0
  %v1019 = vsel %vm30, %v992, 0
  %v1022 = vsel %vm30, %v993, 0
  %v1025 = vsel %vm30, %v994, 0
  %1027 = vmatprep.subr.mxu0 0.0
  %1028 = vmatpush1.msra.mxu0 %v1004
  %1029 = vmatprep.subr.mxu0 0.0
  %1030 = vmatpush1.msra.mxu0 %v1006
  %1031 = vmatprep.subr.mxu0 0.0
  %1032 = vmatpush1.msra.mxu0 %v1008
  %1033 = vmatprep.subr.mxu0 0.0
  %1034 = vmatpush1.msra.mxu0 %v1010
  %1035 = vmatprep.subr.mxu0 0.0
  %1036 = vmatpush1.msra.mxu0 0.0
  %1037 = vmatprep.subr.mxu0 0.0
  %1038 = vmatpush1.msra.mxu0 0.0
  %1039 = vmatprep.subr.mxu0 0.0
  %1040 = vmatpush1.msra.mxu0 0.0
  %1041 = vmatprep.subr.mxu0 0.0
  %1042 = vmatpush1.msra.mxu0 0.0
  %1043 = vmatprep.subr.mxu0 0.0
  %1044 = vmatpush1.msra.mxu0 0.0
  %1045 = vmatprep.subr.mxu0 0.0
  %1046 = vmatpush1.msra.mxu0 0.0
  %1047 = vmatprep.subr.mxu0 0.0
  %1048 = vmatpush1.msra.mxu0 0.0
  %1049 = vmatprep.subr.mxu0 0.0
  %1050 = vmatpush1.msra.mxu0 0.0
  %1051 = vmatprep.subr.mxu0 0.0
  %1052 = vmatpush1.msra.mxu0 0.0
  %1053 = vmatprep.subr.mxu0 0.0
  %1054 = vmatpush1.msra.mxu0 0.0
  %1055 = vmatprep.subr.mxu0 0.0
  %1056 = vmatpush1.msra.mxu0 0.0
  %1057 = vmatprep.subr.mxu0 0.0
  %1058 = vmatpush1.msra.mxu0 0.0
  %1059 = vmatprep.subr.mxu0 0.0
  %1060 = vmatpush1.msra.mxu0 0.0
  %1061 = vmatprep.subr.mxu0 0.0
  %1062 = vmatpush1.msra.mxu0 0.0
  %1063 = vmatprep.subr.mxu0 0.0
  %1064 = vmatpush1.msra.mxu0 0.0
  %1065 = vmatprep.subr.mxu0 0.0
  %1066 = vmatpush1.msra.mxu0 0.0
  %1067 = vmatprep.subr.mxu0 0.0
  %1068 = vmatpush1.msra.mxu0 0.0
  %1069 = vmatprep.subr.mxu0 0.0
  %1070 = vmatpush1.msra.mxu0 0.0
  %1071 = vmatprep.subr.mxu0 0.0
  %1072 = vmatpush1.msra.mxu0 0.0
  %1073 = vmatprep.subr.mxu0 0.0
  %1074 = vmatpush1.msra.mxu0 0.0
  %1075 = vmatprep.subr.mxu0 0.0
  %1076 = vmatpush1.msra.mxu0 0.0
  %1077 = vmatprep.subr.mxu0 0.0
  %1078 = vmatpush1.msra.mxu0 0.0
  %1079 = vmatprep.subr.mxu0 0.0
  %1080 = vmatpush1.msra.mxu0 0.0
  %1081 = vmatprep.subr.mxu0 0.0
  %1082 = vmatpush1.msra.mxu0 0.0
  %1083 = vmatprep.subr.mxu0 0.0
  %1084 = vmatpush1.msra.mxu0 0.0
  %1085 = vmatprep.subr.mxu0 0.0
  %1086 = vmatpush1.msra.mxu0 0.0
  %1087 = vmatprep.subr.mxu0 0.0
  %1088 = vmatpush1.msra.mxu0 0.0
  %1089 = vmatprep.subr.mxu0 0.0
  %1090 = vmatpush1.msra.mxu0 0.0
  %1091 = vmatprep.mubr.f32.mxu0 0.0
  %1092 = vmatmul.mubr.f32.gmra.mrb[0].mxu0 %v1016
  %v1093 = vpop.f32.mrb[0].mxu0
  %v1094 = vadd.f32 %v998, %v1093
  %v1095 = vpop.f32.mrb[0].mxu0
  %1096 = vmatprep.mubr.f32.mxu0 0.0
  %1097 = vmatmul.mubr.f32.gmra.mrb[0].mxu0 %v1019
  %v1098 = vpop.f32.mrb[0].mxu0
  %v1099 = vadd.f32 %v998, %v1098
  %v1100 = vpop.f32.mrb[0].mxu0
  %1101 = vmatprep.mubr.f32.mxu0 0.0
  %1102 = vmatmul.mubr.f32.gmra.mrb[0].mxu0 %v1022
  %v1103 = vpop.f32.mrb[0].mxu0
  %v1104 = vadd.f32 %v998, %v1103
  %v1105 = vpop.f32.mrb[0].mxu0
  %1106 = vmatprep.mubr.f32.mxu0 0.0
  %1107 = vmatmul.mubr.f32.gmra.mrb[0].mxu0 %v1025
  %v1108 = vpop.f32.mrb[0].mxu0
  %v1109 = vadd.f32 %v998, %v1108
  %v1110 = vpop.f32.mrb[0].mxu0
  %1111 = vdwg.mxu0
  %v1112 = vlaneseq
  %v1113 = vshrl.u32 %v1112, 7
  %v1114 = vsub.s32 2, %v1113
  %v1115 = vrot.slane %v22, %v1114
  %v1117 = vsel %vm30, %v1094, 0
  %v1120 = vsel %vm30, %v1099, 0
  %v1123 = vsel %vm30, %v1104, 0
  %v1126 = vsel %vm30, %v1109, 0
  %1128 = vmatprep.subr.mxu0 0.0
  %1129 = vmatpush1.msra.mxu0 %v15
  %1130 = vmatprep.subr.mxu0 0.0
  %1131 = vmatpush1.msra.mxu0 %v17
  %1132 = vmatprep.subr.mxu0 0.0
  %1133 = vmatpush1.msra.mxu0 %v19
  %1134 = vmatprep.subr.mxu0 0.0
  %1135 = vmatpush1.msra.mxu0 %v21
  %1136 = vmatprep.subr.mxu0 0.0
  %1137 = vmatpush1.msra.mxu0 0.0
  %1138 = vmatprep.subr.mxu0 0.0
  %1139 = vmatpush1.msra.mxu0 0.0
  %1140 = vmatprep.subr.mxu0 0.0
  %1141 = vmatpush1.msra.mxu0 0.0
  %1142 = vmatprep.subr.mxu0 0.0
  %1143 = vmatpush1.msra.mxu0 0.0
  %1144 = vmatprep.subr.mxu0 0.0
  %1145 = vmatpush1.msra.mxu0 0.0
  %1146 = vmatprep.subr.mxu0 0.0
  %1147 = vmatpush1.msra.mxu0 0.0
  %1148 = vmatprep.subr.mxu0 0.0
  %1149 = vmatpush1.msra.mxu0 0.0
  %1150 = vmatprep.subr.mxu0 0.0
  %1151 = vmatpush1.msra.mxu0 0.0
  %1152 = vmatprep.subr.mxu0 0.0
  %1153 = vmatpush1.msra.mxu0 0.0
  %1154 = vmatprep.subr.mxu0 0.0
  %1155 = vmatpush1.msra.mxu0 0.0
  %1156 = vmatprep.subr.mxu0 0.0
  %1157 = vmatpush1.msra.mxu0 0.0
  %1158 = vmatprep.subr.mxu0 0.0
  %1159 = vmatpush1.msra.mxu0 0.0
  %1160 = vmatprep.subr.mxu0 0.0
  %1161 = vmatpush1.msra.mxu0 0.0
  %1162 = vmatprep.subr.mxu0 0.0
  %1163 = vmatpush1.msra.mxu0 0.0
  %1164 = vmatprep.subr.mxu0 0.0
  %1165 = vmatpush1.msra.mxu0 0.0
  %1166 = vmatprep.subr.mxu0 0.0
  %1167 = vmatpush1.msra.mxu0 0.0
  %1168 = vmatprep.subr.mxu0 0.0
  %1169 = vmatpush1.msra.mxu0 0.0
  %1170 = vmatprep.subr.mxu0 0.0
  %1171 = vmatpush1.msra.mxu0 0.0
  %1172 = vmatprep.subr.mxu0 0.0
  %1173 = vmatpush1.msra.mxu0 0.0
  %1174 = vmatprep.subr.mxu0 0.0
  %1175 = vmatpush1.msra.mxu0 0.0
  %1176 = vmatprep.subr.mxu0 0.0
  %1177 = vmatpush1.msra.mxu0 0.0
  %1178 = vmatprep.subr.mxu0 0.0
  %1179 = vmatpush1.msra.mxu0 0.0
  %1180 = vmatprep.subr.mxu0 0.0
  %1181 = vmatpush1.msra.mxu0 0.0
  %1182 = vmatprep.subr.mxu0 0.0
  %1183 = vmatpush1.msra.mxu0 0.0
  %1184 = vmatprep.subr.mxu0 0.0
  %1185 = vmatpush1.msra.mxu0 0.0
  %1186 = vmatprep.subr.mxu0 0.0
  %1187 = vmatpush1.msra.mxu0 0.0
  %1188 = vmatprep.subr.mxu0 0.0
  %1189 = vmatpush1.msra.mxu0 0.0
  %1190 = vmatprep.subr.mxu0 0.0
  %1191 = vmatpush1.msra.mxu0 0.0
  %1192 = vmatprep.mubr.f32.mxu0 0.0
  %1193 = vmatmul.mubr.f32.gmra.mrb[0].mxu0 %v1117
  %v1194 = vpop.f32.mrb[0].mxu0
  %v1195 = vadd.f32 %v1115, %v1194
  %v1196 = vpop.f32.mrb[0].mxu0
  %1197 = vmatprep.mubr.f32.mxu0 0.0
  %1198 = vmatmul.mubr.f32.gmra.mrb[0].mxu0 %v1120
  %v1199 = vpop.f32.mrb[0].mxu0
  %v1200 = vadd.f32 %v1115, %v1199
  %v1201 = vpop.f32.mrb[0].mxu0
  %1202 = vmatprep.mubr.f32.mxu0 0.0
  %1203 = vmatmul.mubr.f32.gmra.mrb[0].mxu0 %v1123
  %v1204 = vpop.f32.mrb[0].mxu0
  %v1205 = vadd.f32 %v1115, %v1204
  %v1206 = vpop.f32.mrb[0].mxu0
  %1207 = vmatprep.mubr.f32.mxu0 0.0
  %1208 = vmatmul.mubr.f32.gmra.mrb[0].mxu0 %v1126
  %v1209 = vpop.f32.mrb[0].mxu0
  %v1210 = vadd.f32 %v1115, %v1209
  %v1211 = vpop.f32.mrb[0].mxu0
  %1212 = vdwg.mxu0
  %1213 = vmax.xlane.f32.xlu0 %v1195
  %v1214 = vpop.xlane.xlu0 %1213
  %1215 = vmax.xlane.f32.xlu0 %v1200
  %v1216 = vpop.xlane.xlu0 %1215
  %1217 = vmax.xlane.f32.xlu0 %v1205
  %v1218 = vpop.xlane.xlu0 %1217
  %1219 = vmax.xlane.f32.xlu0 %v1210
  %v1220 = vpop.xlane.xlu0 %1219
  %v1221 = vsub.f32 %v1195, %v1214
  %v1222 = vsub.f32 %v1200, %v1216
  %v1223 = vsub.f32 %v1205, %v1218
  %v1224 = vsub.f32 %v1210, %v1220
  %v1225 = vmul.f32 %v1221, 1.442695
  %v1226 = vpow.pop %v1225
  %v1227 = vmul.f32 %v1222, 1.442695
  %v1228 = vpow.pop %v1227
  %v1229 = vmul.f32 %v1223, 1.442695
  %v1230 = vpow.pop %v1229
  %v1231 = vmul.f32 %v1224, 1.442695
  %v1232 = vpow.pop %v1231
  %1233 = vadd.xlane.f32.xlu0 %v1226
  %v1234 = vpop.xlane.xlu0 %1233
  %1235 = vadd.xlane.f32.xlu0 %v1228
  %v1236 = vpop.xlane.xlu0 %1235
  %1237 = vadd.xlane.f32.xlu0 %v1230
  %v1238 = vpop.xlane.xlu0 %1237
  %1239 = vadd.xlane.f32.xlu0 %v1232
  %v1240 = vpop.xlane.xlu0 %1239
  %v1241 = vlog2.pop %v1234
  %v1242 = vmul.f32 %v1241, 0.6931472
  %v1243 = vlog2.pop %v1236
  %v1244 = vmul.f32 %v1243, 0.6931472
  %v1245 = vlog2.pop %v1238
  %v1246 = vmul.f32 %v1245, 0.6931472
  %v1247 = vlog2.pop %v1240
  %v1248 = vmul.f32 %v1247, 0.6931472
  %v1249 = vsub.f32 %v1221, %v1242
  %v1250 = vsub.f32 %v1222, %v1244
  %v1251 = vsub.f32 %v1223, %v1246
  %v1252 = vsub.f32 %v1224, %v1248
  %1253 = vst [vmem:[%s3] sm:$0xff] %v1249
  %1254 = vst [vmem:[%s3 + $0x8] sm:$0xff] %v1250
  %1255 = vst [vmem:[%s3 + $0x10] sm:$0xff] %v1251
  %1256 = vst [vmem:[%s3 + $0x18] sm:$0xff] %v1252
  // Predicated region
  $region14: #{rnn_decoder_forward.1} parent=0 // pred_check
    _
  $region15: #{rnn_decoder_forward.1} parent=0 // pred_check_branch
    %1258 = sbr.rel (0) target = $region17
  $region16: #{rnn_decoder_forward.1} parent=0 // pred_region
    _
  $region17: #{rnn_decoder_forward.1} parent=0 // pred_fallthru
    _
  // Predicated region
  $region18: #{rnn_decoder_forward.1} parent=0 // pred_check
    _
  $region19: #{rnn_decoder_forward.1} parent=0 // pred_check_branch
    %1260 = sbr.rel (0) target = $region21
  $region20: #{rnn_decoder_forward.1} parent=0 // pred_region
    _
  $region21: #{rnn_decoder_forward.1} parent=0 // pred_fallthru
    _

</llo_original>
